<compile_context>
chip_gen: v7x
topology: tpu7x:2x2x1
jax: 0.10.0
libtpu: 0.0.40
codegen_flags: <defaults>
</compile_context>

<pallas_src>
import math
import numpy as np
import jax
import jax.numpy as jnp
from jax.experimental import pallas as pl
from jax.experimental.pallas import tpu as pltpu


def _round_up(x, m):
    return ((x + m - 1) // m) * m


def _pick_group_chunk(G, copg, target_n=128):
    """Largest divisor of G such that (chunk groups * copg) <= target_n output lanes."""
    limit = max(1, target_n // max(copg, 1))
    gc = 1
    for d in range(1, G + 1):
        if G % d == 0 and d <= limit:
            gc = d
    return gc


def _default_t_tile_cap():
    # Larger time tiles on 128 MiB-VMEM parts (v5e/v6e), smaller on v7x (64 MiB/TC).
    try:
        info = pltpu.get_tpu_info()
        vmem = int(getattr(info, "vmem_capacity_bytes", 64 << 20))
    except Exception:
        vmem = 64 << 20
    return 512 if vmem >= (100 << 20) else 128


def _make_conv1d_kernel(*, K, stride, T_tile, cin, Gc, cin_g, copg, n_chunks,
                        cout_pad, has_halo, leaky_slope):
    Gcin = Gc * cin_g          # contiguous input lanes per chunk (per phase)
    Nc = Gc * copg             # output lanes per chunk

    def kernel(*refs):
        if has_halo:
            xm_ref, xn_ref, w_ref, b_ref, o_ref = refs
            # (T_tile + H_pad, lanes) working slab: main tile + narrow halo.
            x_cat = jnp.concatenate([xm_ref[...], xn_ref[...]], axis=0)
        else:
            xm_ref, w_ref, b_ref, o_ref = refs
            x_cat = xm_ref[...]

        # Static chunk/tap loops: n_chunks*K dots total (<=~330 at production sizes).
        for c in range(n_chunks):
            in0 = c * Gcin               # lane offset of this chunk's groups (per phase)
            col0 = c * Nc                # output lane offset of this chunk
            acc = None
            for k in range(K):           # per-tap accumulation: no im2col concat
                q, p = divmod(k, stride)  # q: reshaped row offset, p: stride phase block
                base = p * cin + in0
                lhs = x_cat[q:q + T_tile, base:base + Gcin]
                d = jnp.dot(lhs, w_ref[c * K + k],
                            preferred_element_type=jnp.float32)   # MXU, f32 acc
                acc = d if acc is None else acc + d
            # Per-chunk epilogue while the chunk is still small (<= T_tile x 128 f32).
            acc = acc + b_ref[:, col0:col0 + Nc]
            if leaky_slope is not None:
                acc = jnp.where(acc >= 0, acc, leaky_slope * acc)
            o_ref[:, col0:col0 + Nc] = acc.astype(o_ref.dtype)
            # Columns [cout, cout_pad) of the output block are never written; they are
            # sliced off in the wrapper, so stale VMEM there is harmless.

    return kernel


def conv1d_pallas(h, w_chunks, bias, *, K, stride, groups, cout, Gc, pad, pad_mode,
                  leaky_slope, t_tile_cap=128):
    """Grouped/dense 1D conv (+ optional LeakyReLU) on a (B, T, Cin) bf16 input.

    w_chunks: (n_chunks*K, Gc*cin_g, Gc*copg) bf16 block-structured per-chunk/tap slabs.
    Returns (B, T_out, cout) bf16.
    """
    B, T, Cin = h.shape
    G = groups
    cin_g = Cin // G
    copg = cout // G
    n_chunks = G // Gc
    Gcin = Gc * cin_g
    Nc = Gc * copg
    assert w_chunks.shape == (n_chunks * K, Gcin, Nc)

    T_p = T + 2 * pad
    T_out = (T_p - K) // stride + 1
    H = (K - 1) // stride                       # halo rows (stride-reshaped coords)
    has_halo = H > 0
    H_pad = _round_up(H, 16) if has_halo else 0  # bf16 sublane packing: 16-row multiple

    T_tile = _round_up(min(t_tile_cap, max(T_out, 1)), 16)
    if has_halo:
        # T_tile must be a multiple of H_pad so the halo block index map stays Blocked.
        T_tile = max(_round_up(T_tile, H_pad), H_pad)
    nT = pl.cdiv(T_out, T_tile)
    cout_pad = _round_up(cout, 128)
    lanes = stride * Cin

    # Rows of the stride-reshaped view; all main and halo blocks must be fully in range.
    L_rows = max(nT * T_tile + H_pad, -(-T_p // stride))
    L = L_rows * stride

    # Merged padding: conv padding + rounding pad in a single jnp.pad for zero-pad layers.
    if pad_mode == 'reflect' and pad > 0:
        h_pp = jnp.pad(h, ((0, 0), (pad, pad), (0, 0)), mode='reflect')
        h_pp = jnp.pad(h_pp, ((0, 0), (0, L - T_p), (0, 0)))
    else:
        h_pp = jnp.pad(h, ((0, 0), (pad, L - T - pad), (0, 0)))
    # Space-to-depth (skip when stride == 1): strided taps become contiguous sublane reads
    # plus static lane slices (no strided vld).
    x_r = h_pp if stride == 1 else h_pp.reshape(B, L_rows, lanes)

    b_pad = jnp.zeros((1, cout_pad), jnp.float32).at[0, :cout].set(
        bias.astype(jnp.float32))

    kernel = _make_conv1d_kernel(K=K, stride=stride, T_tile=T_tile, cin=Cin, Gc=Gc,
                                 cin_g=cin_g, copg=copg, n_chunks=n_chunks,
                                 cout_pad=cout_pad, has_halo=has_halo,
                                 leaky_slope=leaky_slope)

    in_specs = [pl.BlockSpec((None, T_tile, lanes), lambda b, i: (b, i, 0))]
    inputs = [x_r]
    if has_halo:
        r = T_tile // H_pad   # halo starts at row (i+1)*T_tile == block index (i+1)*r
        in_specs.append(
            pl.BlockSpec((None, H_pad, lanes), lambda b, i: (b, (i + 1) * r, 0)))
        inputs.append(x_r)
    in_specs += [
        pl.BlockSpec((n_chunks * K, Gcin, Nc), lambda b, i: (0, 0, 0)),
        pl.BlockSpec((1, cout_pad), lambda b, i: (0, 0)),
    ]
    inputs += [w_chunks, b_pad]

    # Cost estimate (actual MXU flops incl. block-diag zeros; honest halo byte count).
    mxu_flops = int(2 * B * nT * T_tile * n_chunks * K * Gcin * Nc)
    bytes_accessed = int(B * nT * (T_tile + H_pad) * lanes * 2
                         + w_chunks.size * 2 + cout_pad * 4
                         + B * nT * T_tile * cout_pad * 2)

    # Per-layer VMEM budget from actual buffer sizes (double-buffered specs + temporaries).
    in_b = T_tile * lanes * 2
    halo_b = H_pad * lanes * 2
    out_b = T_tile * cout_pad * 2
    w_b = int(w_chunks.size) * 2
    bias_b = cout_pad * 4
    tmp_b = (T_tile + H_pad) * lanes * 2 + 2 * T_tile * Nc * 4 + 2 * T_tile * Gcin * 2
    vmem_need = 2 * (in_b + halo_b + out_b + w_b + bias_b) + tmp_b
    vmem_limit = int(min(max(int(vmem_need * 1.5) + (4 << 20), 16 << 20), 64 << 20))

    out = pl.pallas_call(
        kernel,
        out_shape=jax.ShapeDtypeStruct((B, nT * T_tile, cout_pad), jnp.bfloat16),
        grid=(B, nT),
        in_specs=in_specs,
        out_specs=pl.BlockSpec((None, T_tile, cout_pad), lambda b, i: (b, i, 0)),
        compiler_params=pltpu.CompilerParams(
            dimension_semantics=("parallel", "parallel"),
            vmem_limit_bytes=vmem_limit),
        cost_estimate=pl.CostEstimate(flops=mxu_flops, transcendentals=0,
                                      bytes_accessed=bytes_accessed),
    )(*inputs)
    return out[:, :T_out, :cout]


def conv1d_xla(h, w_oik, bias, *, K, stride, groups, pad, pad_mode, leaky_slope):
    """Plain XLA conv path for tiny-channel layers (stride*Cin < 128): (B,T,C) bf16 in/out."""
    del K
    if pad_mode == 'reflect' and pad > 0:
        h_p = jnp.pad(h, ((0, 0), (pad, pad), (0, 0)), mode='reflect')
        padding = [(0, 0)]
    else:
        h_p = h
        padding = [(pad, pad)]
    w = jnp.transpose(w_oik.astype(jnp.float32), (2, 1, 0))   # (K, cin_g, cout) = 'WIO'
    y = jax.lax.conv_general_dilated(
        h_p.astype(jnp.float32), w, window_strides=(stride,), padding=padding,
        dimension_numbers=('NWC', 'WIO', 'NWC'),
        feature_group_count=groups, precision=jax.lax.Precision.HIGHEST)
    y = y + bias.astype(jnp.float32)[None, None, :]
    if leaky_slope is not None:
        y = jnp.where(y >= 0, y, leaky_slope * y)
    return y.astype(jnp.bfloat16)


def build_scale_discriminator_params(key, in_channels=1, out_channels=1,
                                     kernel_sizes=(5, 3), filters=16,
                                     max_filters=1024, downsample_scales=(4, 4, 4, 4)):
    """Mirror ScaleDiscriminator.__init__ layer structure; deterministic synthetic weights."""
    assert len(kernel_sizes) == 2
    assert kernel_sizes[0] % 2 == 1 and kernel_sizes[1] % 2 == 1

    specs = []
    k0 = int(np.prod(kernel_sizes))
    # convs[0]: ReflectionPad1d((prod(ks)-1)//2) + Conv1d(in, filters, prod(ks), stride=1)
    specs.append(dict(cin=in_channels, cout=filters, k=k0, stride=1,
                      padding=(k0 - 1) // 2, groups=1, pad_mode='reflect', act=True))
    in_chs = filters
    for ds in downsample_scales:
        out_chs = min(in_chs * ds, max_filters)
        kk = ds * 10 + 1
        specs.append(dict(cin=in_chs, cout=out_chs, k=kk, stride=ds,
                          padding=(kk - 1) // 2, groups=max(in_chs // 4, 1),
                          pad_mode='zero', act=True))
        in_chs = out_chs
    out_chs = min(in_chs * 2, max_filters)
    specs.append(dict(cin=in_chs, cout=out_chs, k=kernel_sizes[0], stride=1,
                      padding=(kernel_sizes[0] - 1) // 2, groups=1,
                      pad_mode='zero', act=True))
    # conv_post (no activation)
    specs.append(dict(cin=out_chs, cout=out_channels, k=kernel_sizes[1], stride=1,
                      padding=(kernel_sizes[1] - 1) // 2, groups=1,
                      pad_mode='zero', act=False))

    params = []
    for s in specs:
        key, kw, kb = jax.random.split(key, 3)
        G = s['groups']; cin_g = s['cin'] // G; copg = s['cout'] // G; K = s['k']
        fan_in = cin_g * K
        w = jax.random.normal(kw, (s['cout'], cin_g, K), jnp.float32) / math.sqrt(fan_in)
        b = 0.01 * jax.random.normal(kb, (s['cout'],), jnp.float32)
        w_bf = w.astype(jnp.bfloat16)                        # bf16 weights for the MXU

        # Group-chunk packing: chunks of Gc groups -> per-chunk per-tap block-structured
        # slab (Gc*cin_g, Gc*copg); flattened to (n_chunks*K, ., .) for simple ref indexing.
        Gc = _pick_group_chunk(G, copg)
        n_chunks = G // Gc
        w_np = np.asarray(w)                                 # (cout, cin_g, K) f32, host-side
        slab = np.zeros((n_chunks, K, Gc * cin_g, Gc * copg), np.float32)
        for c in range(n_chunks):
            for gg in range(Gc):
                g = c * Gc + gg
                blk = w_np[g * copg:(g + 1) * copg].transpose(2, 1, 0)   # (K, cin_g, copg)
                slab[c, :, gg * cin_g:(gg + 1) * cin_g,
                     gg * copg:(gg + 1) * copg] = blk
        w_chunks = jnp.asarray(slab.reshape(n_chunks * K, Gc * cin_g, Gc * copg),
                               dtype=jnp.bfloat16)

        params.append(dict(spec=s, w_oik=w_bf, w_chunks=w_chunks, Gc=Gc, b=b))
    return params


def scale_discriminator_forward(x_ncl, params, *, t_tile_cap=None, pallas_min_lanes=128):
    """x_ncl: (B, Cin, T) f32, PyTorch NCL layout.  Returns (x, fmap), both NCL f32."""
    if t_tile_cap is None:
        t_tile_cap = _default_t_tile_cap()
    h = jnp.transpose(x_ncl, (0, 2, 1)).astype(jnp.bfloat16)   # (B, T, C), bf16 activations
    fmap_btc = []
    for p in params:
        s = p['spec']
        slope = 0.2 if s['act'] else None
        lanes = s['stride'] * s['cin']
        if lanes < pallas_min_lanes:
            # 1-lane / few-lane layers are pure HBM bandwidth; run them as a plain XLA conv.
            h = conv1d_xla(h, p['w_oik'], p['b'], K=s['k'], stride=s['stride'],
                           groups=s['groups'], pad=s['padding'], pad_mode=s['pad_mode'],
                           leaky_slope=slope)
        else:
            h = conv1d_pallas(h, p['w_chunks'], p['b'], K=s['k'], stride=s['stride'],
                              groups=s['groups'], cout=s['cout'], Gc=p['Gc'],
                              pad=s['padding'], pad_mode=s['pad_mode'],
                              leaky_slope=slope, t_tile_cap=t_tile_cap)
        fmap_btc.append(h)
    # Layers chain in (B, T, C); convert to PyTorch NCL only once at the boundary.
    fmap = [jnp.transpose(f, (0, 2, 1)).astype(jnp.float32) for f in fmap_btc]
    return fmap[-1], fmap


def ref_forward(x_ncl, params):
    """Pure-JAX reference matching the PyTorch forward with the same bf16-storage numerics."""
    h = x_ncl.astype(jnp.bfloat16).astype(jnp.float32)
    fmap = []
    for p in params:
        s = p['spec']
        pad = s['padding']
        if s['pad_mode'] == 'reflect':
            hp = jnp.pad(h, ((0, 0), (0, 0), (pad, pad)), mode='reflect')
            padding = [(0, 0)]
        else:
            hp = h
            padding = [(pad, pad)]
        w = p['w_oik'].astype(jnp.float32)
        y = jax.lax.conv_general_dilated(
            hp, w, window_strides=(s['stride'],), padding=padding,
            dimension_numbers=('NCH', 'OIH', 'NCH'),
            feature_group_count=s['groups'],
            precision=jax.lax.Precision.HIGHEST)
        y = y + p['b'][None, :, None]
        if s['act']:
            y = jnp.where(y >= 0, y, 0.2 * y)
        y = y.astype(jnp.bfloat16).astype(jnp.float32)   # emulate bf16 inter-layer storage
        h = y
        fmap.append(y)
    return h, fmap


if __name__ == "__main__":
    key = jax.random.PRNGKey(0)
    k_in, k_params = jax.random.split(key)

    # Small, consistent configuration (constructor hyperparameters scaled down).
    B, Cin, T = 2, 1, 128
    x = jax.random.normal(k_in, (B, Cin, T), jnp.float32)
    params = build_scale_discriminator_params(
        k_params, in_channels=Cin, out_channels=1, kernel_sizes=(5, 3),
        filters=4, max_filters=32, downsample_scales=(2, 2))

    # t_tile_cap=16 forces multiple time tiles (narrow-halo path across real data) on the
    # strided and dense layers; pallas_min_lanes=8 routes only the 1-lane first layer to the
    # XLA fallback so the Pallas path is exercised everywhere else.
    out, fmap = scale_discriminator_forward(x, params, t_tile_cap=16, pallas_min_lanes=8)
    out = jax.block_until_ready(out)
    fmap = [jax.block_until_ready(f) for f in fmap]

    ref_out, ref_fmap = ref_forward(x, params)
    assert out.shape == ref_out.shape, (out.shape, ref_out.shape)
    for a, b in zip(fmap, ref_fmap):
        np.testing.assert_allclose(np.asarray(a), np.asarray(b), rtol=2e-2, atol=2e-2)

    print("KERNEL_OK")
</pallas_src>

<mosaic_0001>
module attributes {stable_mosaic.version = 11 : i64} {
  func.func @kernel(%arg0: i32, %arg1: i32, %arg2: memref<1x16x8xbf16, #tpu.memory_space<vmem>>, %arg3: memref<1x16x8xbf16, #tpu.memory_space<vmem>>, %arg4: memref<21x4x8xbf16, #tpu.memory_space<vmem>>, %arg5: memref<1x128xf32, #tpu.memory_space<vmem>>, %arg6: memref<1x16x128xbf16, #tpu.memory_space<vmem>>) attributes {dimension_semantics = [#tpu.dimension_semantics<parallel>, #tpu.dimension_semantics<parallel>], iteration_bounds = array<i64: 2, 4>, scalar_prefetch = 0 : i64, scratch_operands = 0 : i64, tpu.core_type = #tpu.core_type<tc>, window_params = [{transform_indices = @transform_0, window_bounds = array<i64: 1, 16, 8>}, {transform_indices = @transform_1, window_bounds = array<i64: 1, 16, 8>}, {pipeline_mode = #tpu.pipeline_mode<synchronous>, transform_indices = @transform_2, window_bounds = array<i64: 21, 4, 8>}, {pipeline_mode = #tpu.pipeline_mode<synchronous>, transform_indices = @transform_3, window_bounds = array<i64: 1, 128>}, {transform_indices = @transform_4, window_bounds = array<i64: 1, 16, 128>}]} {
    %c0 = arith.constant 0 : index
    %c0_0 = arith.constant 0 : index
    %c0_1 = arith.constant 0 : index
    %0 = vector.load %arg2[%c0, %c0_0, %c0_1] : memref<1x16x8xbf16, #tpu.memory_space<vmem>>, vector<1x16x8xbf16>
    %1 = vector.shape_cast %0 : vector<1x16x8xbf16> to vector<16x8xbf16>
    %c0_2 = arith.constant 0 : index
    %c0_3 = arith.constant 0 : index
    %c0_4 = arith.constant 0 : index
    %2 = vector.load %arg3[%c0_2, %c0_3, %c0_4] : memref<1x16x8xbf16, #tpu.memory_space<vmem>>, vector<1x16x8xbf16>
    %3 = vector.shape_cast %2 : vector<1x16x8xbf16> to vector<16x8xbf16>
    %4 = tpu.concatenate %1, %3 in 0 : vector<16x8xbf16>, vector<16x8xbf16> -> vector<32x8xbf16>
    %5 = vector.extract_strided_slice %4 {offsets = [0, 0], sizes = [16, 4], strides = [1, 1]} : vector<32x8xbf16> to vector<16x4xbf16>
    %c0_5 = arith.constant 0 : index
    %c0_6 = arith.constant 0 : index
    %c0_7 = arith.constant 0 : index
    %6 = vector.load %arg4[%c0_5, %c0_6, %c0_7] : memref<21x4x8xbf16, #tpu.memory_space<vmem>>, vector<1x4x8xbf16>
    %7 = vector.shape_cast %6 : vector<1x4x8xbf16> to vector<4x8xbf16>
    %cst = arith.constant dense<0.000000e+00> : vector<16x8xf32>
    %8 = tpu.matmul %5, %7, %cst {dimension_numbers = #tpu.dot_dimension_numbers<[1], [0], [0], [1], [0, 0, 1, 1], [], []>} : vector<16x4xbf16>, vector<4x8xbf16>, vector<16x8xf32> -> vector<16x8xf32>
    %9 = vector.extract_strided_slice %4 {offsets = [0, 4], sizes = [16, 4], strides = [1, 1]} : vector<32x8xbf16> to vector<16x4xbf16>
    %c1 = arith.constant 1 : index
    %c0_8 = arith.constant 0 : index
    %c0_9 = arith.constant 0 : index
    %10 = vector.load %arg4[%c1, %c0_8, %c0_9] : memref<21x4x8xbf16, #tpu.memory_space<vmem>>, vector<1x4x8xbf16>
    %11 = vector.shape_cast %10 : vector<1x4x8xbf16> to vector<4x8xbf16>
    %cst_10 = arith.constant dense<0.000000e+00> : vector<16x8xf32>
    %12 = tpu.matmul %9, %11, %cst_10 {dimension_numbers = #tpu.dot_dimension_numbers<[1], [0], [0], [1], [0, 0, 1, 1], [], []>} : vector<16x4xbf16>, vector<4x8xbf16>, vector<16x8xf32> -> vector<16x8xf32>
    %13 = arith.addf %8, %12 : vector<16x8xf32>
    %14 = vector.extract_strided_slice %4 {offsets = [1, 0], sizes = [16, 4], strides = [1, 1]} : vector<32x8xbf16> to vector<16x4xbf16>
    %c2 = arith.constant 2 : index
    %c0_11 = arith.constant 0 : index
    %c0_12 = arith.constant 0 : index
    %15 = vector.load %arg4[%c2, %c0_11, %c0_12] : memref<21x4x8xbf16, #tpu.memory_space<vmem>>, vector<1x4x8xbf16>
    %16 = vector.shape_cast %15 : vector<1x4x8xbf16> to vector<4x8xbf16>
    %cst_13 = arith.constant dense<0.000000e+00> : vector<16x8xf32>
    %17 = tpu.matmul %14, %16, %cst_13 {dimension_numbers = #tpu.dot_dimension_numbers<[1], [0], [0], [1], [0, 0, 1, 1], [], []>} : vector<16x4xbf16>, vector<4x8xbf16>, vector<16x8xf32> -> vector<16x8xf32>
    %18 = arith.addf %13, %17 : vector<16x8xf32>
    %19 = vector.extract_strided_slice %4 {offsets = [1, 4], sizes = [16, 4], strides = [1, 1]} : vector<32x8xbf16> to vector<16x4xbf16>
    %c3 = arith.constant 3 : index
    %c0_14 = arith.constant 0 : index
    %c0_15 = arith.constant 0 : index
    %20 = vector.load %arg4[%c3, %c0_14, %c0_15] : memref<21x4x8xbf16, #tpu.memory_space<vmem>>, vector<1x4x8xbf16>
    %21 = vector.shape_cast %20 : vector<1x4x8xbf16> to vector<4x8xbf16>
    %cst_16 = arith.constant dense<0.000000e+00> : vector<16x8xf32>
    %22 = tpu.matmul %19, %21, %cst_16 {dimension_numbers = #tpu.dot_dimension_numbers<[1], [0], [0], [1], [0, 0, 1, 1], [], []>} : vector<16x4xbf16>, vector<4x8xbf16>, vector<16x8xf32> -> vector<16x8xf32>
    %23 = arith.addf %18, %22 : vector<16x8xf32>
    %24 = vector.extract_strided_slice %4 {offsets = [2, 0], sizes = [16, 4], strides = [1, 1]} : vector<32x8xbf16> to vector<16x4xbf16>
    %c4 = arith.constant 4 : index
    %c0_17 = arith.constant 0 : index
    %c0_18 = arith.constant 0 : index
    %25 = vector.load %arg4[%c4, %c0_17, %c0_18] : memref<21x4x8xbf16, #tpu.memory_space<vmem>>, vector<1x4x8xbf16>
    %26 = vector.shape_cast %25 : vector<1x4x8xbf16> to vector<4x8xbf16>
    %cst_19 = arith.constant dense<0.000000e+00> : vector<16x8xf32>
    %27 = tpu.matmul %24, %26, %cst_19 {dimension_numbers = #tpu.dot_dimension_numbers<[1], [0], [0], [1], [0, 0, 1, 1], [], []>} : vector<16x4xbf16>, vector<4x8xbf16>, vector<16x8xf32> -> vector<16x8xf32>
    %28 = arith.addf %23, %27 : vector<16x8xf32>
    %29 = vector.extract_strided_slice %4 {offsets = [2, 4], sizes = [16, 4], strides = [1, 1]} : vector<32x8xbf16> to vector<16x4xbf16>
    %c5 = arith.constant 5 : index
    %c0_20 = arith.constant 0 : index
    %c0_21 = arith.constant 0 : index
    %30 = vector.load %arg4[%c5, %c0_20, %c0_21] : memref<21x4x8xbf16, #tpu.memory_space<vmem>>, vector<1x4x8xbf16>
    %31 = vector.shape_cast %30 : vector<1x4x8xbf16> to vector<4x8xbf16>
    %cst_22 = arith.constant dense<0.000000e+00> : vector<16x8xf32>
    %32 = tpu.matmul %29, %31, %cst_22 {dimension_numbers = #tpu.dot_dimension_numbers<[1], [0], [0], [1], [0, 0, 1, 1], [], []>} : vector<16x4xbf16>, vector<4x8xbf16>, vector<16x8xf32> -> vector<16x8xf32>
    %33 = arith.addf %28, %32 : vector<16x8xf32>
    %34 = vector.extract_strided_slice %4 {offsets = [3, 0], sizes = [16, 4], strides = [1, 1]} : vector<32x8xbf16> to vector<16x4xbf16>
    %c6 = arith.constant 6 : index
    %c0_23 = arith.constant 0 : index
    %c0_24 = arith.constant 0 : index
    %35 = vector.load %arg4[%c6, %c0_23, %c0_24] : memref<21x4x8xbf16, #tpu.memory_space<vmem>>, vector<1x4x8xbf16>
    %36 = vector.shape_cast %35 : vector<1x4x8xbf16> to vector<4x8xbf16>
    %cst_25 = arith.constant dense<0.000000e+00> : vector<16x8xf32>
    %37 = tpu.matmul %34, %36, %cst_25 {dimension_numbers = #tpu.dot_dimension_numbers<[1], [0], [0], [1], [0, 0, 1, 1], [], []>} : vector<16x4xbf16>, vector<4x8xbf16>, vector<16x8xf32> -> vector<16x8xf32>
    %38 = arith.addf %33, %37 : vector<16x8xf32>
    %39 = vector.extract_strided_slice %4 {offsets = [3, 4], sizes = [16, 4], strides = [1, 1]} : vector<32x8xbf16> to vector<16x4xbf16>
    %c7 = arith.constant 7 : index
    %c0_26 = arith.constant 0 : index
    %c0_27 = arith.constant 0 : index
    %40 = vector.load %arg4[%c7, %c0_26, %c0_27] : memref<21x4x8xbf16, #tpu.memory_space<vmem>>, vector<1x4x8xbf16>
    %41 = vector.shape_cast %40 : vector<1x4x8xbf16> to vector<4x8xbf16>
    %cst_28 = arith.constant dense<0.000000e+00> : vector<16x8xf32>
    %42 = tpu.matmul %39, %41, %cst_28 {dimension_numbers = #tpu.dot_dimension_numbers<[1], [0], [0], [1], [0, 0, 1, 1], [], []>} : vector<16x4xbf16>, vector<4x8xbf16>, vector<16x8xf32> -> vector<16x8xf32>
    %43 = arith.addf %38, %42 : vector<16x8xf32>
    %44 = vector.extract_strided_slice %4 {offsets = [4, 0], sizes = [16, 4], strides = [1, 1]} : vector<32x8xbf16> to vector<16x4xbf16>
    %c8 = arith.constant 8 : index
    %c0_29 = arith.constant 0 : index
    %c0_30 = arith.constant 0 : index
    %45 = vector.load %arg4[%c8, %c0_29, %c0_30] : memref<21x4x8xbf16, #tpu.memory_space<vmem>>, vector<1x4x8xbf16>
    %46 = vector.shape_cast %45 : vector<1x4x8xbf16> to vector<4x8xbf16>
    %cst_31 = arith.constant dense<0.000000e+00> : vector<16x8xf32>
    %47 = tpu.matmul %44, %46, %cst_31 {dimension_numbers = #tpu.dot_dimension_numbers<[1], [0], [0], [1], [0, 0, 1, 1], [], []>} : vector<16x4xbf16>, vector<4x8xbf16>, vector<16x8xf32> -> vector<16x8xf32>
    %48 = arith.addf %43, %47 : vector<16x8xf32>
    %49 = vector.extract_strided_slice %4 {offsets = [4, 4], sizes = [16, 4], strides = [1, 1]} : vector<32x8xbf16> to vector<16x4xbf16>
    %c9 = arith.constant 9 : index
    %c0_32 = arith.constant 0 : index
    %c0_33 = arith.constant 0 : index
    %50 = vector.load %arg4[%c9, %c0_32, %c0_33] : memref<21x4x8xbf16, #tpu.memory_space<vmem>>, vector<1x4x8xbf16>
    %51 = vector.shape_cast %50 : vector<1x4x8xbf16> to vector<4x8xbf16>
    %cst_34 = arith.constant dense<0.000000e+00> : vector<16x8xf32>
    %52 = tpu.matmul %49, %51, %cst_34 {dimension_numbers = #tpu.dot_dimension_numbers<[1], [0], [0], [1], [0, 0, 1, 1], [], []>} : vector<16x4xbf16>, vector<4x8xbf16>, vector<16x8xf32> -> vector<16x8xf32>
    %53 = arith.addf %48, %52 : vector<16x8xf32>
    %54 = vector.extract_strided_slice %4 {offsets = [5, 0], sizes = [16, 4], strides = [1, 1]} : vector<32x8xbf16> to vector<16x4xbf16>
    %c10 = arith.constant 10 : index
    %c0_35 = arith.constant 0 : index
    %c0_36 = arith.constant 0 : index
    %55 = vector.load %arg4[%c10, %c0_35, %c0_36] : memref<21x4x8xbf16, #tpu.memory_space<vmem>>, vector<1x4x8xbf16>
    %56 = vector.shape_cast %55 : vector<1x4x8xbf16> to vector<4x8xbf16>
    %cst_37 = arith.constant dense<0.000000e+00> : vector<16x8xf32>
    %57 = tpu.matmul %54, %56, %cst_37 {dimension_numbers = #tpu.dot_dimension_numbers<[1], [0], [0], [1], [0, 0, 1, 1], [], []>} : vector<16x4xbf16>, vector<4x8xbf16>, vector<16x8xf32> -> vector<16x8xf32>
    %58 = arith.addf %53, %57 : vector<16x8xf32>
    %59 = vector.extract_strided_slice %4 {offsets = [5, 4], sizes = [16, 4], strides = [1, 1]} : vector<32x8xbf16> to vector<16x4xbf16>
    %c11 = arith.constant 11 : index
    %c0_38 = arith.constant 0 : index
    %c0_39 = arith.constant 0 : index
    %60 = vector.load %arg4[%c11, %c0_38, %c0_39] : memref<21x4x8xbf16, #tpu.memory_space<vmem>>, vector<1x4x8xbf16>
    %61 = vector.shape_cast %60 : vector<1x4x8xbf16> to vector<4x8xbf16>
    %cst_40 = arith.constant dense<0.000000e+00> : vector<16x8xf32>
    %62 = tpu.matmul %59, %61, %cst_40 {dimension_numbers = #tpu.dot_dimension_numbers<[1], [0], [0], [1], [0, 0, 1, 1], [], []>} : vector<16x4xbf16>, vector<4x8xbf16>, vector<16x8xf32> -> vector<16x8xf32>
    %63 = arith.addf %58, %62 : vector<16x8xf32>
    %64 = vector.extract_strided_slice %4 {offsets = [6, 0], sizes = [16, 4], strides = [1, 1]} : vector<32x8xbf16> to vector<16x4xbf16>
    %c12 = arith.constant 12 : index
    %c0_41 = arith.constant 0 : index
    %c0_42 = arith.constant 0 : index
    %65 = vector.load %arg4[%c12, %c0_41, %c0_42] : memref<21x4x8xbf16, #tpu.memory_space<vmem>>, vector<1x4x8xbf16>
    %66 = vector.shape_cast %65 : vector<1x4x8xbf16> to vector<4x8xbf16>
    %cst_43 = arith.constant dense<0.000000e+00> : vector<16x8xf32>
    %67 = tpu.matmul %64, %66, %cst_43 {dimension_numbers = #tpu.dot_dimension_numbers<[1], [0], [0], [1], [0, 0, 1, 1], [], []>} : vector<16x4xbf16>, vector<4x8xbf16>, vector<16x8xf32> -> vector<16x8xf32>
    %68 = arith.addf %63, %67 : vector<16x8xf32>
    %69 = vector.extract_strided_slice %4 {offsets = [6, 4], sizes = [16, 4], strides = [1, 1]} : vector<32x8xbf16> to vector<16x4xbf16>
    %c13 = arith.constant 13 : index
    %c0_44 = arith.constant 0 : index
    %c0_45 = arith.constant 0 : index
    %70 = vector.load %arg4[%c13, %c0_44, %c0_45] : memref<21x4x8xbf16, #tpu.memory_space<vmem>>, vector<1x4x8xbf16>
    %71 = vector.shape_cast %70 : vector<1x4x8xbf16> to vector<4x8xbf16>
    %cst_46 = arith.constant dense<0.000000e+00> : vector<16x8xf32>
    %72 = tpu.matmul %69, %71, %cst_46 {dimension_numbers = #tpu.dot_dimension_numbers<[1], [0], [0], [1], [0, 0, 1, 1], [], []>} : vector<16x4xbf16>, vector<4x8xbf16>, vector<16x8xf32> -> vector<16x8xf32>
    %73 = arith.addf %68, %72 : vector<16x8xf32>
    %74 = vector.extract_strided_slice %4 {offsets = [7, 0], sizes = [16, 4], strides = [1, 1]} : vector<32x8xbf16> to vector<16x4xbf16>
    %c14 = arith.constant 14 : index
    %c0_47 = arith.constant 0 : index
    %c0_48 = arith.constant 0 : index
    %75 = vector.load %arg4[%c14, %c0_47, %c0_48] : memref<21x4x8xbf16, #tpu.memory_space<vmem>>, vector<1x4x8xbf16>
    %76 = vector.shape_cast %75 : vector<1x4x8xbf16> to vector<4x8xbf16>
    %cst_49 = arith.constant dense<0.000000e+00> : vector<16x8xf32>
    %77 = tpu.matmul %74, %76, %cst_49 {dimension_numbers = #tpu.dot_dimension_numbers<[1], [0], [0], [1], [0, 0, 1, 1], [], []>} : vector<16x4xbf16>, vector<4x8xbf16>, vector<16x8xf32> -> vector<16x8xf32>
    %78 = arith.addf %73, %77 : vector<16x8xf32>
    %79 = vector.extract_strided_slice %4 {offsets = [7, 4], sizes = [16, 4], strides = [1, 1]} : vector<32x8xbf16> to vector<16x4xbf16>
    %c15 = arith.constant 15 : index
    %c0_50 = arith.constant 0 : index
    %c0_51 = arith.constant 0 : index
    %80 = vector.load %arg4[%c15, %c0_50, %c0_51] : memref<21x4x8xbf16, #tpu.memory_space<vmem>>, vector<1x4x8xbf16>
    %81 = vector.shape_cast %80 : vector<1x4x8xbf16> to vector<4x8xbf16>
    %cst_52 = arith.constant dense<0.000000e+00> : vector<16x8xf32>
    %82 = tpu.matmul %79, %81, %cst_52 {dimension_numbers = #tpu.dot_dimension_numbers<[1], [0], [0], [1], [0, 0, 1, 1], [], []>} : vector<16x4xbf16>, vector<4x8xbf16>, vector<16x8xf32> -> vector<16x8xf32>
    %83 = arith.addf %78, %82 : vector<16x8xf32>
    %84 = vector.extract_strided_slice %4 {offsets = [8, 0], sizes = [16, 4], strides = [1, 1]} : vector<32x8xbf16> to vector<16x4xbf16>
    %c16 = arith.constant 16 : index
    %c0_53 = arith.constant 0 : index
    %c0_54 = arith.constant 0 : index
    %85 = vector.load %arg4[%c16, %c0_53, %c0_54] : memref<21x4x8xbf16, #tpu.memory_space<vmem>>, vector<1x4x8xbf16>
    %86 = vector.shape_cast %85 : vector<1x4x8xbf16> to vector<4x8xbf16>
    %cst_55 = arith.constant dense<0.000000e+00> : vector<16x8xf32>
    %87 = tpu.matmul %84, %86, %cst_55 {dimension_numbers = #tpu.dot_dimension_numbers<[1], [0], [0], [1], [0, 0, 1, 1], [], []>} : vector<16x4xbf16>, vector<4x8xbf16>, vector<16x8xf32> -> vector<16x8xf32>
    %88 = arith.addf %83, %87 : vector<16x8xf32>
    %89 = vector.extract_strided_slice %4 {offsets = [8, 4], sizes = [16, 4], strides = [1, 1]} : vector<32x8xbf16> to vector<16x4xbf16>
    %c17 = arith.constant 17 : index
    %c0_56 = arith.constant 0 : index
    %c0_57 = arith.constant 0 : index
    %90 = vector.load %arg4[%c17, %c0_56, %c0_57] : memref<21x4x8xbf16, #tpu.memory_space<vmem>>, vector<1x4x8xbf16>
    %91 = vector.shape_cast %90 : vector<1x4x8xbf16> to vector<4x8xbf16>
    %cst_58 = arith.constant dense<0.000000e+00> : vector<16x8xf32>
    %92 = tpu.matmul %89, %91, %cst_58 {dimension_numbers = #tpu.dot_dimension_numbers<[1], [0], [0], [1], [0, 0, 1, 1], [], []>} : vector<16x4xbf16>, vector<4x8xbf16>, vector<16x8xf32> -> vector<16x8xf32>
    %93 = arith.addf %88, %92 : vector<16x8xf32>
    %94 = vector.extract_strided_slice %4 {offsets = [9, 0], sizes = [16, 4], strides = [1, 1]} : vector<32x8xbf16> to vector<16x4xbf16>
    %c18 = arith.constant 18 : index
    %c0_59 = arith.constant 0 : index
    %c0_60 = arith.constant 0 : index
    %95 = vector.load %arg4[%c18, %c0_59, %c0_60] : memref<21x4x8xbf16, #tpu.memory_space<vmem>>, vector<1x4x8xbf16>
    %96 = vector.shape_cast %95 : vector<1x4x8xbf16> to vector<4x8xbf16>
    %cst_61 = arith.constant dense<0.000000e+00> : vector<16x8xf32>
    %97 = tpu.matmul %94, %96, %cst_61 {dimension_numbers = #tpu.dot_dimension_numbers<[1], [0], [0], [1], [0, 0, 1, 1], [], []>} : vector<16x4xbf16>, vector<4x8xbf16>, vector<16x8xf32> -> vector<16x8xf32>
    %98 = arith.addf %93, %97 : vector<16x8xf32>
    %99 = vector.extract_strided_slice %4 {offsets = [9, 4], sizes = [16, 4], strides = [1, 1]} : vector<32x8xbf16> to vector<16x4xbf16>
    %c19 = arith.constant 19 : index
    %c0_62 = arith.constant 0 : index
    %c0_63 = arith.constant 0 : index
    %100 = vector.load %arg4[%c19, %c0_62, %c0_63] : memref<21x4x8xbf16, #tpu.memory_space<vmem>>, vector<1x4x8xbf16>
    %101 = vector.shape_cast %100 : vector<1x4x8xbf16> to vector<4x8xbf16>
    %cst_64 = arith.constant dense<0.000000e+00> : vector<16x8xf32>
    %102 = tpu.matmul %99, %101, %cst_64 {dimension_numbers = #tpu.dot_dimension_numbers<[1], [0], [0], [1], [0, 0, 1, 1], [], []>} : vector<16x4xbf16>, vector<4x8xbf16>, vector<16x8xf32> -> vector<16x8xf32>
    %103 = arith.addf %98, %102 : vector<16x8xf32>
    %104 = vector.extract_strided_slice %4 {offsets = [10, 0], sizes = [16, 4], strides = [1, 1]} : vector<32x8xbf16> to vector<16x4xbf16>
    %c20 = arith.constant 20 : index
    %c0_65 = arith.constant 0 : index
    %c0_66 = arith.constant 0 : index
    %105 = vector.load %arg4[%c20, %c0_65, %c0_66] : memref<21x4x8xbf16, #tpu.memory_space<vmem>>, vector<1x4x8xbf16>
    %106 = vector.shape_cast %105 : vector<1x4x8xbf16> to vector<4x8xbf16>
    %cst_67 = arith.constant dense<0.000000e+00> : vector<16x8xf32>
    %107 = tpu.matmul %104, %106, %cst_67 {dimension_numbers = #tpu.dot_dimension_numbers<[1], [0], [0], [1], [0, 0, 1, 1], [], []>} : vector<16x4xbf16>, vector<4x8xbf16>, vector<16x8xf32> -> vector<16x8xf32>
    %108 = arith.addf %103, %107 : vector<16x8xf32>
    %c0_68 = arith.constant 0 : index
    %c0_69 = arith.constant 0 : index
    %109 = vector.load %arg5[%c0_68, %c0_69] : memref<1x128xf32, #tpu.memory_space<vmem>>, vector<1x8xf32>
    %110 = vector.broadcast %109 : vector<1x8xf32> to vector<16x8xf32>
    %111 = arith.addf %108, %110 : vector<16x8xf32>
    %cst_70 = arith.constant 0.000000e+00 : f32
    %112 = vector.broadcast %cst_70 : f32 to vector<16x8xf32>
    %113 = arith.cmpf oge, %111, %112 : vector<16x8xf32>
    %cst_71 = arith.constant 2.000000e-01 : f32
    %114 = vector.broadcast %cst_71 : f32 to vector<16x8xf32>
    %115 = arith.mulf %114, %111 : vector<16x8xf32>
    %116 = arith.select %113, %111, %115 : vector<16x8xi1>, vector<16x8xf32>
    %117 = arith.truncf %116 : vector<16x8xf32> to vector<16x8xbf16>
    %c0_72 = arith.constant 0 : index
    %c0_73 = arith.constant 0 : index
    %c0_74 = arith.constant 0 : index
    %118 = vector.load %arg6[%c0_72, %c0_73, %c0_74] : memref<1x16x128xbf16, #tpu.memory_space<vmem>>, vector<1x16x8xbf16>
    %119 = vector.shape_cast %118 : vector<1x16x8xbf16> to vector<16x8xbf16>
    %120 = vector.shape_cast %117 : vector<16x8xbf16> to vector<1x16x8xbf16>
    tpu.vector_store %arg6[%c0_72, %c0_73, %c0_74], %120 {strides = array<i32>} : memref<1x16x128xbf16, #tpu.memory_space<vmem>>, vector<1x16x8xbf16>,
    return
  }
  func.func @transform_0(%arg0: i32, %arg1: i32) -> (i32, i32, i32) {
    %c0_i32 = arith.constant 0 : i32
    %c0_i32_0 = arith.constant 0 : i32
    return %arg0, %arg1, %c0_i32 : i32, i32, i32
  }
  func.func @transform_1(%arg0: i32, %arg1: i32) -> (i32, i32, i32) {
    %c1_i32 = arith.constant 1 : i32
    %0 = arith.addi %arg1, %c1_i32 : i32
    %c1_i32_0 = arith.constant 1 : i32
    %1 = arith.muli %0, %c1_i32_0 : i32
    %c0_i32 = arith.constant 0 : i32
    %c0_i32_1 = arith.constant 0 : i32
    return %arg0, %1, %c0_i32 : i32, i32, i32
  }
  func.func @transform_2(%arg0: i32, %arg1: i32) -> (i32, i32, i32) {
    %c0_i32 = arith.constant 0 : i32
    %c0_i32_0 = arith.constant 0 : i32
    %c0_i32_1 = arith.constant 0 : i32
    %c0_i32_2 = arith.constant 0 : i32
    return %c0_i32, %c0_i32_0, %c0_i32_1 : i32, i32, i32
  }
  func.func @transform_3(%arg0: i32, %arg1: i32) -> (i32, i32) {
    %c0_i32 = arith.constant 0 : i32
    %c0_i32_0 = arith.constant 0 : i32
    %c0_i32_1 = arith.constant 0 : i32
    return %c0_i32, %c0_i32_0 : i32, i32
  }
  func.func @transform_4(%arg0: i32, %arg1: i32) -> (i32, i32, i32) {
    %c0_i32 = arith.constant 0 : i32
    %c0_i32_0 = arith.constant 0 : i32
    return %arg0, %arg1, %c0_i32 : i32, i32, i32
  }
}

</mosaic_0001>

<llo_original>
// kernel: tpu_custom_call.1
$region0: #{tpu_custom_call.1}
  #allocation0 [shape = 'u32[]', space=smem, size = 0x4, offset = 0x4, fixed_abs, tag = 'smem constant byte address 0x4 - core index']
  #allocation1 [shape = 'u32[144,128]{1,0:T(1,128)}', space=vmem, size = 0x12000, scoped, tag = 'internal scratch']
  %s0 = inlined_call_operand.vmem [shape: bf16[2,80,8], index: 0, kind: input, shape index: {}]
  %s1 = inlined_call_operand.vmem [shape: bf16[2,80,8], index: 1, kind: input, shape index: {}]
  %s2 = inlined_call_operand.vmem [shape: bf16[21,4,8], index: 2, kind: input, shape index: {}]
  %s3 = inlined_call_operand.vmem [shape: f32[1,128], index: 3, kind: input, shape index: {}]
  %s4 = inlined_call_operand.hbm [shape: bf16[2,64,128], index: 4, kind: output, shape index: {}]
  %s5 = sld [smem:[#allocation0]]
  $region49: #{tpu_custom_call.1} parent=0
    _
  %s7 = ssub.s32 1, %s5
  %s8 = scalar_select 0, %s7, %s5
  $region1: #{tpu_custom_call.1} parent=0
    #allocation2 [shape = 'u8[8192]{0}', space=vmem, size = 0x2000, scoped, tag = 'output window, operand 0']
    #allocation3 [shape = 's32[2]{0}', space=sflag, size = 0x8, scoped, tag = 'scoped memory for tpu_custom_call.1']
    %9 = vsyncpa [#allocation3], 0
    %s10 = scalar_lea.sflag [#allocation3], 1
    %11 = vsyncpa %s10, 0
    loop: start=0, step=1, limit=10
    $region2: #{tpu_custom_call.1} parent=1 // loop_pre_header
      _
    $region3: #{tpu_custom_call.1} parent=1 // loop_header
      %s13 = sphi 0, %s17
      %p14 = scmp.ge.s32.totalorder %s13, 10
      %s20 = sphi 0, %s32
      %s21 = sphi 0, %s28
      %s22 = sphi 0, %s20
      %s23 = sphi 0, %s21
      %s24 = sphi 0, %s22
      %s25 = sphi 0, %s23
      %s37 = sphi 0, %s39
      %s40 = sphi 0, %s37
      %s41 = sphi 0, %s40
      %s57 = sphi 0, %s41
      %s67 = sphi 0, %s69
      %s70 = sphi 0, %s67
      %s71 = sphi 0, %s70
      %s87 = sphi 0, %s71
      %s91 = sphi 0, %s91
      %s93 = sphi 0, %s91
      %s94 = sphi 0, %s93
      %s108 = sphi 0, %s94
      %s112 = sphi 0, %s112
      %s114 = sphi 0, %s112
      %s115 = sphi 0, %s114
      %s129 = sphi 0, %s115
      %s137 = sphi 0, %s139
      %s140 = sphi 0, %s137
      %s141 = sphi 0, %s140
      %s157 = sphi 0, %s141
    $region4: #{tpu_custom_call.1} parent=1 // loop_header_branch
      %16 = sbr.rel (%p14) target = $region8
    $region5: #{tpu_custom_call.1} parent=1 // loop_body
      %s18 = ssub.s32 %s13, 1
      %s19 = ssub.s32 %s13, 2
      %s26 = sadd.s32 1, %s21
      %p27 = scmp.ge.s32.totalorder %s26, 4
      %s28 = scalar_select %p27, 0, %s26
      %s29 = sadd.s32 1, %s20
      %s30 = scalar_select %p27, %s29, %s20
      %p31 = scmp.ge.s32.totalorder %s30, 2
      %s32 = scalar_select %p31, 0, %s30
      %s33 = ssub.s32 %s20, %s32
      %s34 = ssub.s32 %s21, %s28
      %s35 = sor.u32 %s33, %s34
      %p36 = scmp.eq.s32.totalorder %s35, 0
      %s38 = sadd.s32 %s37, 1
      %s39 = scalar_select %p36, %s37, %s38
      %p42 = pneg %p36
      %p43 = scmp.eq.s32.totalorder %s13, 7
      %p44 = por %p42, %p43
      %p45 = scmp.ne.s32.totalorder %s37, %s40
      %p46 = scmp.eq.s32.totalorder %s13, 0
      %p47 = por %p45, %p46
      %p48 = scmp.ne.s32.totalorder %s37, %s40
      %p49 = scmp.eq.s32.totalorder %s18, 7
      %p50 = por %p48, %p49
      %p51 = scmp.ne.s32.totalorder %s40, %s41
      %p52 = scmp.eq.s32.totalorder %s18, 0
      %p53 = por %p51, %p52
      %p54 = scmp.ne.s32.totalorder %s40, %s41
      %p55 = scmp.eq.s32.totalorder %s19, 7
      %p56 = por %p54, %p55
      %p58 = scmp.ne.s32.totalorder %s41, %s57
      %p59 = scmp.eq.s32.totalorder %s19, 0
      %p60 = por %p58, %p59
      %s61 = sadd.s32 %s21, 1
      %s62 = sadd.s32 %s28, 1
      %s63 = ssub.s32 %s20, %s32
      %s64 = ssub.s32 %s61, %s62
      %s65 = sor.u32 %s63, %s64
      %p66 = scmp.eq.s32.totalorder %s65, 0
      %s68 = sadd.s32 %s67, 1
      %s69 = scalar_select %p66, %s67, %s68
      %p72 = pneg %p66
      %p73 = scmp.eq.s32.totalorder %s13, 7
      %p74 = por %p72, %p73
      %p75 = scmp.ne.s32.totalorder %s67, %s70
      %p76 = scmp.eq.s32.totalorder %s13, 0
      %p77 = por %p75, %p76
      %p78 = scmp.ne.s32.totalorder %s67, %s70
      %p79 = scmp.eq.s32.totalorder %s18, 7
      %p80 = por %p78, %p79
      %p81 = scmp.ne.s32.totalorder %s70, %s71
      %p82 = scmp.eq.s32.totalorder %s18, 0
      %p83 = por %p81, %p82
      %p84 = scmp.ne.s32.totalorder %s70, %s71
      %p85 = scmp.eq.s32.totalorder %s19, 7
      %p86 = por %p84, %p85
      %p88 = scmp.ne.s32.totalorder %s71, %s87
      %p89 = scmp.eq.s32.totalorder %s19, 0
      %p90 = por %p88, %p89
      %s92 = sadd.s32 %s91, 1
      %p95 = scmp.eq.s32.totalorder %s13, 7
      %p96 = scmp.ne.s32.totalorder %s91, %s93
      %p97 = scmp.eq.s32.totalorder %s13, 0
      %p98 = por %p96, %p97
      %p99 = scmp.ne.s32.totalorder %s91, %s93
      %p100 = scmp.eq.s32.totalorder %s18, 7
      %p101 = por %p99, %p100
      %p102 = scmp.ne.s32.totalorder %s93, %s94
      %p103 = scmp.eq.s32.totalorder %s18, 0
      %p104 = por %p102, %p103
      %p105 = scmp.ne.s32.totalorder %s93, %s94
      %p106 = scmp.eq.s32.totalorder %s19, 7
      %p107 = por %p105, %p106
      %p109 = scmp.ne.s32.totalorder %s94, %s108
      %p110 = scmp.eq.s32.totalorder %s19, 0
      %p111 = por %p109, %p110
      %s113 = sadd.s32 %s112, 1
      %p116 = scmp.eq.s32.totalorder %s13, 7
      %p117 = scmp.ne.s32.totalorder %s112, %s114
      %p118 = scmp.eq.s32.totalorder %s13, 0
      %p119 = por %p117, %p118
      %p120 = scmp.ne.s32.totalorder %s112, %s114
      %p121 = scmp.eq.s32.totalorder %s18, 7
      %p122 = por %p120, %p121
      %p123 = scmp.ne.s32.totalorder %s114, %s115
      %p124 = scmp.eq.s32.totalorder %s18, 0
      %p125 = por %p123, %p124
      %p126 = scmp.ne.s32.totalorder %s114, %s115
      %p127 = scmp.eq.s32.totalorder %s19, 7
      %p128 = por %p126, %p127
      %p130 = scmp.ne.s32.totalorder %s115, %s129
      %p131 = scmp.eq.s32.totalorder %s19, 0
      %p132 = por %p130, %p131
      %s133 = ssub.s32 %s20, %s32
      %s134 = ssub.s32 %s21, %s28
      %s135 = sor.u32 %s133, %s134
      %p136 = scmp.eq.s32.totalorder %s135, 0
      %s138 = sadd.s32 %s137, 1
      %s139 = scalar_select %p136, %s137, %s138
      %p142 = pneg %p136
      %p143 = scmp.eq.s32.totalorder %s13, 7
      %p144 = por %p142, %p143
      %p145 = scmp.ne.s32.totalorder %s137, %s140
      %p146 = scmp.eq.s32.totalorder %s13, 0
      %p147 = por %p145, %p146
      %p148 = scmp.ne.s32.totalorder %s137, %s140
      %p149 = scmp.eq.s32.totalorder %s18, 7
      %p150 = por %p148, %p149
      %p151 = scmp.ne.s32.totalorder %s140, %s141
      %p152 = scmp.eq.s32.totalorder %s18, 0
      %p153 = por %p151, %p152
      %p154 = scmp.ne.s32.totalorder %s140, %s141
      %p155 = scmp.eq.s32.totalorder %s19, 7
      %p156 = por %p154, %p155
      %p158 = scmp.ne.s32.totalorder %s141, %s157
      %p159 = scmp.eq.s32.totalorder %s19, 0
      %p160 = por %p158, %p159
      %p161 = scmp.le.s32.totalorder 1, %s13
      %p162 = scmp.lt.s32.totalorder %s13, 9
      %p163 = pnand %p161, %p162
      %p164 = pneg %p163
      // Predicated region
      $region9: #{tpu_custom_call.1} parent=5 // pred_check
        _
      $region10: #{tpu_custom_call.1} parent=5 // pred_check_branch
        %166 = sbr.rel (%p163) target = $region12
      $region11: #{tpu_custom_call.1} parent=5 // pred_region
        %s167 = ssub.s32 %s13, 1
        // Predicated region
        $region13: #{tpu_custom_call.1} parent=11 // pred_check
          %p168 = pneg %p104
        $region14: #{tpu_custom_call.1} parent=11 // pred_check_branch
          %170 = sbr.rel (%p168) target = $region16
        $region15: #{tpu_custom_call.1} parent=11 // pred_region
          _
        $region16: #{tpu_custom_call.1} parent=11 // pred_fallthru
          _
        // Predicated region
        $region17: #{tpu_custom_call.1} parent=11 // pred_check
          %p171 = pneg %p125
        $region18: #{tpu_custom_call.1} parent=11 // pred_check_branch
          %173 = sbr.rel (%p171) target = $region20
        $region19: #{tpu_custom_call.1} parent=11 // pred_region
          _
        $region20: #{tpu_custom_call.1} parent=11 // pred_fallthru
          _
      $region12: #{tpu_custom_call.1} parent=5 // pred_fallthru
        _
      %p174 = scmp.lt.s32.totalorder %s13, 8
      // Predicated region
      $region21: #{tpu_custom_call.1} parent=5 // pred_check
        %p175 = pneg %p174
      $region22: #{tpu_custom_call.1} parent=5 // pred_check_branch
        %177 = sbr.rel (%p175) target = $region24
      $region23: #{tpu_custom_call.1} parent=5 // pred_region
        // Predicated region
        $region25: #{tpu_custom_call.1} parent=23 // pred_check
          %p178 = pneg %p47
        $region26: #{tpu_custom_call.1} parent=23 // pred_check_branch
          %180 = sbr.rel (%p178) target = $region28
        $region27: #{tpu_custom_call.1} parent=23 // pred_region
          %s181 = smul.u32 2, %s21
          %p182 = scmp.lt.s32.totalorder %s20, 1
          %s183 = scalar_select %p182, %s20, 1
          %p184 = scmp.lt.s32.totalorder %s181, 9
          %s185 = scalar_select %p184, %s181, 9
          %s186 = smul.addr %s183, 10
          %s187 = sadd.s32 %s185, %s186
          %s188 = smul.addr %s187, 4
          %s189 = scalar_lea.vmem %s0, %s188
          %s190 = smul.u32 2, %s21
        $region28: #{tpu_custom_call.1} parent=23 // pred_fallthru
          _
        // Predicated region
        $region29: #{tpu_custom_call.1} parent=23 // pred_check
          %p191 = pneg %p77
        $region30: #{tpu_custom_call.1} parent=23 // pred_check_branch
          %193 = sbr.rel (%p191) target = $region32
        $region31: #{tpu_custom_call.1} parent=23 // pred_region
          %s194 = sadd.s32 %s21, 1
          %s195 = smul.u32 2, %s194
          %p196 = scmp.lt.s32.totalorder %s20, 1
          %s197 = scalar_select %p196, %s20, 1
          %p198 = scmp.lt.s32.totalorder %s195, 9
          %s199 = scalar_select %p198, %s195, 9
          %s200 = smul.addr %s197, 10
          %s201 = sadd.s32 %s199, %s200
          %s202 = smul.addr %s201, 4
          %s203 = scalar_lea.vmem %s1, %s202
          %s204 = sadd.s32 %s21, 1
          %s205 = smul.u32 2, %s204
        $region32: #{tpu_custom_call.1} parent=23 // pred_fallthru
          _
      $region24: #{tpu_custom_call.1} parent=5 // pred_fallthru
        _
      %p206 = scmp.le.s32.totalorder 1, %s13
      %p207 = scmp.lt.s32.totalorder %s13, 9
      %p208 = pnand %p206, %p207
      %p209 = pneg %p208
      // Predicated region
      $region33: #{tpu_custom_call.1} parent=5 // pred_check
        _
      $region34: #{tpu_custom_call.1} parent=5 // pred_check_branch
        %211 = sbr.rel (%p208) target = $region36
      $region35: #{tpu_custom_call.1} parent=5 // pred_region
        %s212 = ssub.s32 %s13, 1
        %s213 = smul.u32 2, %s23
        %p214 = scmp.lt.s32.totalorder %s22, 1
        %s215 = scalar_select %p214, %s22, 1
        %p216 = scmp.lt.s32.totalorder %s213, 9
        %s217 = scalar_select %p216, %s213, 9
        %s218 = smul.addr %s215, 10
        %s219 = sadd.s32 %s217, %s218
        %s220 = smul.addr %s219, 4
        %s221 = scalar_lea.vmem %s0, %s220
        %p222 = pneg %p53
        %p223 = pneg %p50
        %s224 = sadd.s32 %s23, 1
        %s225 = smul.u32 2, %s224
        %p226 = scmp.lt.s32.totalorder %s22, 1
        %s227 = scalar_select %p226, %s22, 1
        %p228 = scmp.lt.s32.totalorder %s225, 9
        %s229 = scalar_select %p228, %s225, 9
        %s230 = smul.addr %s227, 10
        %s231 = sadd.s32 %s229, %s230
        %s232 = smul.addr %s231, 4
        %s233 = scalar_lea.vmem %s1, %s232
        %p234 = pneg %p83
        %p235 = pneg %p80
        %p236 = pneg %p104
        %p237 = pneg %p101
        %p238 = pneg %p125
        %p239 = pneg %p122
        %p240 = pneg %p153
        %p241 = pneg %p150
        %s242 = sand.u32 %s140, 1
        %s243 = scalar_lea.sflag [#allocation3], %s242
        %s244 = sand.u32 %s140, 1
        %s245 = smul.addr %s244, 8
        %s246 = scalar_lea.vmem [#allocation2], %s245
        %s247 = smul.u32 2, %s23
        %p248 = scmp.lt.s32.totalorder %s22, 1
        %s249 = scalar_select %p248, %s22, 1
        %p250 = scmp.lt.s32.totalorder %s247, 9
        %s251 = scalar_select %p250, %s247, 9
        %s252 = smul.addr %s249, 10
        %s253 = sadd.s32 %s251, %s252
        %s254 = smul.addr %s253, 4
        %s255 = scalar_lea.vmem %s0, %s254
        %s256 = smul.u32 2, %s23
        %s257 = sadd.s32 %s23, 1
        %s258 = smul.u32 2, %s257
        %p259 = scmp.lt.s32.totalorder %s22, 1
        %s260 = scalar_select %p259, %s22, 1
        %p261 = scmp.lt.s32.totalorder %s258, 9
        %s262 = scalar_select %p261, %s258, 9
        %s263 = smul.addr %s260, 10
        %s264 = sadd.s32 %s262, %s263
        %s265 = smul.addr %s264, 4
        %s266 = scalar_lea.vmem %s1, %s265
        %s267 = sadd.s32 %s23, 1
        %s268 = smul.u32 2, %s267
        %s269 = smul.u32 2, %s23
        %v271 = vld [vmem:[%s255] sm:$0xf]
        %v272 = vld [vmem:[%s255 + $0x4] sm:$0xf]
        %v273 = vld [vmem:[%s266] sm:$0xf]
        %v274 = vld [vmem:[%s266 + $0x4] sm:$0xf]
        %v277 = vunpack.c.l.b16 %v271
        %v278 = vunpack.c.l.b16 %v272
        %v279 = vpack.c.b16 %v278, %v277
        %v282 = vunpack.c.l.b16 %v273
        %v283 = vunpack.c.l.b16 %v274
        %v284 = vpack.c.b16 %v283, %v282
        %v285 = vld [vmem:[%s2] sm:$0x3]
        %s286 = scalar_lea.vmem %s2, 2
        %v287 = vld [vmem:[%s286] sm:$0x3]
        %288 = vrot.lane.b32.xlu0 %v279, 124
        %v289 = vpop.permute.xlu0 %288
        %vm290 = vcmask 31744
        %v292 = vsel %vm290, %v289, 0
        %vm294 = vcmask 1041408
        %v296 = vsel %vm294, %v287, 0
        %298 = vmatprep.subr.bf16.mxu0 0
        %299 = vmatpush1.bf16.msra.mxu0 %v296
        %300 = vmatprep.subr.bf16.mxu0 0
        %301 = vmatpush1.bf16.msra.mxu0 0
        %302 = vmatprep.subr.bf16.mxu0 0
        %303 = vmatpush1.bf16.msra.mxu0 0
        %304 = vmatprep.subr.bf16.mxu0 0
        %305 = vmatpush1.bf16.msra.mxu0 0
        %306 = vmatprep.subr.bf16.mxu0 0
        %307 = vmatpush1.bf16.msra.mxu0 0
        %308 = vmatprep.subr.bf16.mxu0 0
        %309 = vmatpush1.bf16.msra.mxu0 0
        %310 = vmatprep.subr.bf16.mxu0 0
        %311 = vmatpush1.bf16.msra.mxu0 0
        %312 = vmatprep.subr.bf16.mxu0 0
        %313 = vmatpush1.bf16.msra.mxu0 0
        %314 = vmatprep.subr.bf16.mxu0 0
        %315 = vmatpush1.bf16.msra.mxu0 0
        %316 = vmatprep.subr.bf16.mxu0 0
        %317 = vmatpush1.bf16.msra.mxu0 0
        %318 = vmatprep.subr.bf16.mxu0 0
        %319 = vmatpush1.bf16.msra.mxu0 0
        %320 = vmatprep.subr.bf16.mxu0 0
        %321 = vmatpush1.bf16.msra.mxu0 0
        %322 = vmatprep.subr.bf16.mxu0 0
        %323 = vmatpush1.bf16.msra.mxu0 0
        %324 = vmatprep.subr.bf16.mxu0 0
        %325 = vmatpush1.bf16.msra.mxu0 0
        %326 = vmatprep.subr.bf16.mxu0 0
        %327 = vmatpush1.bf16.msra.mxu0 0
        %328 = vmatprep.subr.bf16.mxu0 0
        %329 = vmatpush1.bf16.msra.mxu0 0
        %330 = vmatprep.mubr.bf16.mxu0 0
        %331 = vmatmul.mubr.bf16.gmra.mrb[0].mxu0 %v292
        %v332 = vpop.f32.mrb[0].mxu0
        %v333 = vadd.f32 0.0, %v332
        %v334 = vpop.f32.mrb[0].mxu0
        %v335 = vpop.f32.mrb[0].mxu0
        %v336 = vadd.f32 0.0, %v335
        %v337 = vpop.f32.mrb[0].mxu0
        %338 = vdwg.mxu0
        %v340 = vsel %vm290, %v279, 0
        %v343 = vsel %vm294, %v285, 0
        %345 = vmatprep.subr.bf16.mxu0 0
        %346 = vmatpush1.bf16.msra.mxu0 %v343
        %347 = vmatprep.subr.bf16.mxu0 0
        %348 = vmatpush1.bf16.msra.mxu0 0
        %349 = vmatprep.subr.bf16.mxu0 0
        %350 = vmatpush1.bf16.msra.mxu0 0
        %351 = vmatprep.subr.bf16.mxu0 0
        %352 = vmatpush1.bf16.msra.mxu0 0
        %353 = vmatprep.subr.bf16.mxu0 0
        %354 = vmatpush1.bf16.msra.mxu0 0
        %355 = vmatprep.subr.bf16.mxu0 0
        %356 = vmatpush1.bf16.msra.mxu0 0
        %357 = vmatprep.subr.bf16.mxu0 0
        %358 = vmatpush1.bf16.msra.mxu0 0
        %359 = vmatprep.subr.bf16.mxu0 0
        %360 = vmatpush1.bf16.msra.mxu0 0
        %361 = vmatprep.subr.bf16.mxu0 0
        %362 = vmatpush1.bf16.msra.mxu0 0
        %363 = vmatprep.subr.bf16.mxu0 0
        %364 = vmatpush1.bf16.msra.mxu0 0
        %365 = vmatprep.subr.bf16.mxu0 0
        %366 = vmatpush1.bf16.msra.mxu0 0
        %367 = vmatprep.subr.bf16.mxu0 0
        %368 = vmatpush1.bf16.msra.mxu0 0
        %369 = vmatprep.subr.bf16.mxu0 0
        %370 = vmatpush1.bf16.msra.mxu0 0
        %371 = vmatprep.subr.bf16.mxu0 0
        %372 = vmatpush1.bf16.msra.mxu0 0
        %373 = vmatprep.subr.bf16.mxu0 0
        %374 = vmatpush1.bf16.msra.mxu0 0
        %375 = vmatprep.subr.bf16.mxu0 0
        %376 = vmatpush1.bf16.msra.mxu0 0
        %377 = vmatprep.mubr.bf16.mxu0 0
        %378 = vmatmul.mubr.bf16.gmra.mrb[0].mxu0 %v340
        %v379 = vpop.f32.mrb[0].mxu0
        %v380 = vadd.f32 %v333, %v379
        %v381 = vpop.f32.mrb[0].mxu0
        %v382 = vpop.f32.mrb[0].mxu0
        %v383 = vadd.f32 %v336, %v382
        %v384 = vpop.f32.mrb[0].mxu0
        %385 = vdwg.mxu0
        %s386 = scalar_lea.vmem %s2, 4
        %v387 = vld [vmem:[%s386] sm:$0x3]
        %vm388 = vsmask.f32 7424
        %v389 = vshrl.u32 %v279, 16
        %v391 = vshll.u32 %v279, 16
        %v393 = vrot.slane %v391, 1
        %v394 = vor.u32 %v389, %v393
        %v396 = vshll.u32 %v284, 16
        %v398 = vrot.slane %v396, 1
        %v399 = vsel %vm388, %v394, %v398
        %v401 = vsel %vm290, %v399, 0
        %v404 = vsel %vm294, %v387, 0
        %406 = vmatprep.subr.bf16.mxu0 0
        %407 = vmatpush1.bf16.msra.mxu0 %v404
        %408 = vmatprep.subr.bf16.mxu0 0
        %409 = vmatpush1.bf16.msra.mxu0 0
        %410 = vmatprep.subr.bf16.mxu0 0
        %411 = vmatpush1.bf16.msra.mxu0 0
        %412 = vmatprep.subr.bf16.mxu0 0
        %413 = vmatpush1.bf16.msra.mxu0 0
        %414 = vmatprep.subr.bf16.mxu0 0
        %415 = vmatpush1.bf16.msra.mxu0 0
        %416 = vmatprep.subr.bf16.mxu0 0
        %417 = vmatpush1.bf16.msra.mxu0 0
        %418 = vmatprep.subr.bf16.mxu0 0
        %419 = vmatpush1.bf16.msra.mxu0 0
        %420 = vmatprep.subr.bf16.mxu0 0
        %421 = vmatpush1.bf16.msra.mxu0 0
        %422 = vmatprep.subr.bf16.mxu0 0
        %423 = vmatpush1.bf16.msra.mxu0 0
        %424 = vmatprep.subr.bf16.mxu0 0
        %425 = vmatpush1.bf16.msra.mxu0 0
        %426 = vmatprep.subr.bf16.mxu0 0
        %427 = vmatpush1.bf16.msra.mxu0 0
        %428 = vmatprep.subr.bf16.mxu0 0
        %429 = vmatpush1.bf16.msra.mxu0 0
        %430 = vmatprep.subr.bf16.mxu0 0
        %431 = vmatpush1.bf16.msra.mxu0 0
        %432 = vmatprep.subr.bf16.mxu0 0
        %433 = vmatpush1.bf16.msra.mxu0 0
        %434 = vmatprep.subr.bf16.mxu0 0
        %435 = vmatpush1.bf16.msra.mxu0 0
        %436 = vmatprep.subr.bf16.mxu0 0
        %437 = vmatpush1.bf16.msra.mxu0 0
        %438 = vmatprep.mubr.bf16.mxu0 0
        %439 = vmatmul.mubr.bf16.gmra.mrb[0].mxu0 %v401
        %v440 = vpop.f32.mrb[0].mxu0
        %v441 = vadd.f32 0.0, %v440
        %v442 = vpop.f32.mrb[0].mxu0
        %v443 = vpop.f32.mrb[0].mxu0
        %v444 = vadd.f32 0.0, %v443
        %v445 = vpop.f32.mrb[0].mxu0
        %446 = vdwg.mxu0
        %v447 = vadd.f32 %v380, %v441
        %v448 = vadd.f32 %v383, %v444
        %s449 = scalar_lea.vmem %s2, 6
        %v450 = vld [vmem:[%s449] sm:$0x3]
        %451 = vrot.lane.b32.xlu0 %v399, 124
        %v452 = vpop.permute.xlu0 %451
        %v454 = vsel %vm290, %v452, 0
        %v457 = vsel %vm294, %v450, 0
        %459 = vmatprep.subr.bf16.mxu0 0
        %460 = vmatpush1.bf16.msra.mxu0 %v457
        %461 = vmatprep.subr.bf16.mxu0 0
        %462 = vmatpush1.bf16.msra.mxu0 0
        %463 = vmatprep.subr.bf16.mxu0 0
        %464 = vmatpush1.bf16.msra.mxu0 0
        %465 = vmatprep.subr.bf16.mxu0 0
        %466 = vmatpush1.bf16.msra.mxu0 0
        %467 = vmatprep.subr.bf16.mxu0 0
        %468 = vmatpush1.bf16.msra.mxu0 0
        %469 = vmatprep.subr.bf16.mxu0 0
        %470 = vmatpush1.bf16.msra.mxu0 0
        %471 = vmatprep.subr.bf16.mxu0 0
        %472 = vmatpush1.bf16.msra.mxu0 0
        %473 = vmatprep.subr.bf16.mxu0 0
        %474 = vmatpush1.bf16.msra.mxu0 0
        %475 = vmatprep.subr.bf16.mxu0 0
        %476 = vmatpush1.bf16.msra.mxu0 0
        %477 = vmatprep.subr.bf16.mxu0 0
        %478 = vmatpush1.bf16.msra.mxu0 0
        %479 = vmatprep.subr.bf16.mxu0 0
        %480 = vmatpush1.bf16.msra.mxu0 0
        %481 = vmatprep.subr.bf16.mxu0 0
        %482 = vmatpush1.bf16.msra.mxu0 0
        %483 = vmatprep.subr.bf16.mxu0 0
        %484 = vmatpush1.bf16.msra.mxu0 0
        %485 = vmatprep.subr.bf16.mxu0 0
        %486 = vmatpush1.bf16.msra.mxu0 0
        %487 = vmatprep.subr.bf16.mxu0 0
        %488 = vmatpush1.bf16.msra.mxu0 0
        %489 = vmatprep.subr.bf16.mxu0 0
        %490 = vmatpush1.bf16.msra.mxu0 0
        %491 = vmatprep.mubr.bf16.mxu0 0
        %492 = vmatmul.mubr.bf16.gmra.mrb[0].mxu0 %v454
        %v493 = vpop.f32.mrb[0].mxu0
        %v494 = vadd.f32 0.0, %v493
        %v495 = vpop.f32.mrb[0].mxu0
        %v496 = vpop.f32.mrb[0].mxu0
        %v497 = vadd.f32 0.0, %v496
        %v498 = vpop.f32.mrb[0].mxu0
        %499 = vdwg.mxu0
        %v500 = vadd.f32 %v447, %v494
        %v501 = vadd.f32 %v448, %v497
        %s502 = scalar_lea.vmem %s2, 8
        %v503 = vld [vmem:[%s502] sm:$0x3]
        %vm504 = vcmask 1046528
        %v505 = vrot.slane %v279, 1
        %v506 = vrot.slane %v284, 1
        %v507 = vsel %vm504, %v505, %v506
        %v509 = vsel %vm290, %v507, 0
        %v512 = vsel %vm294, %v503, 0
        %514 = vmatprep.subr.bf16.mxu0 0
        %515 = vmatpush1.bf16.msra.mxu0 %v512
        %516 = vmatprep.subr.bf16.mxu0 0
        %517 = vmatpush1.bf16.msra.mxu0 0
        %518 = vmatprep.subr.bf16.mxu0 0
        %519 = vmatpush1.bf16.msra.mxu0 0
        %520 = vmatprep.subr.bf16.mxu0 0
        %521 = vmatpush1.bf16.msra.mxu0 0
        %522 = vmatprep.subr.bf16.mxu0 0
        %523 = vmatpush1.bf16.msra.mxu0 0
        %524 = vmatprep.subr.bf16.mxu0 0
        %525 = vmatpush1.bf16.msra.mxu0 0
        %526 = vmatprep.subr.bf16.mxu0 0
        %527 = vmatpush1.bf16.msra.mxu0 0
        %528 = vmatprep.subr.bf16.mxu0 0
        %529 = vmatpush1.bf16.msra.mxu0 0
        %530 = vmatprep.subr.bf16.mxu0 0
        %531 = vmatpush1.bf16.msra.mxu0 0
        %532 = vmatprep.subr.bf16.mxu0 0
        %533 = vmatpush1.bf16.msra.mxu0 0
        %534 = vmatprep.subr.bf16.mxu0 0
        %535 = vmatpush1.bf16.msra.mxu0 0
        %536 = vmatprep.subr.bf16.mxu0 0
        %537 = vmatpush1.bf16.msra.mxu0 0
        %538 = vmatprep.subr.bf16.mxu0 0
        %539 = vmatpush1.bf16.msra.mxu0 0
        %540 = vmatprep.subr.bf16.mxu0 0
        %541 = vmatpush1.bf16.msra.mxu0 0
        %542 = vmatprep.subr.bf16.mxu0 0
        %543 = vmatpush1.bf16.msra.mxu0 0
        %544 = vmatprep.subr.bf16.mxu0 0
        %545 = vmatpush1.bf16.msra.mxu0 0
        %546 = vmatprep.mubr.bf16.mxu0 0
        %547 = vmatmul.mubr.bf16.gmra.mrb[0].mxu0 %v509
        %v548 = vpop.f32.mrb[0].mxu0
        %v549 = vadd.f32 0.0, %v548
        %v550 = vpop.f32.mrb[0].mxu0
        %v551 = vpop.f32.mrb[0].mxu0
        %v552 = vadd.f32 0.0, %v551
        %v553 = vpop.f32.mrb[0].mxu0
        %554 = vdwg.mxu0
        %v555 = vadd.f32 %v500, %v549
        %v556 = vadd.f32 %v501, %v552
        %s557 = scalar_lea.vmem %s2, 10
        %v558 = vld [vmem:[%s557] sm:$0x3]
        %559 = vrot.lane.b32.xlu0 %v507, 124
        %v560 = vpop.permute.xlu0 %559
        %v562 = vsel %vm290, %v560, 0
        %v565 = vsel %vm294, %v558, 0
        %567 = vmatprep.subr.bf16.mxu0 0
        %568 = vmatpush1.bf16.msra.mxu0 %v565
        %569 = vmatprep.subr.bf16.mxu0 0
        %570 = vmatpush1.bf16.msra.mxu0 0
        %571 = vmatprep.subr.bf16.mxu0 0
        %572 = vmatpush1.bf16.msra.mxu0 0
        %573 = vmatprep.subr.bf16.mxu0 0
        %574 = vmatpush1.bf16.msra.mxu0 0
        %575 = vmatprep.subr.bf16.mxu0 0
        %576 = vmatpush1.bf16.msra.mxu0 0
        %577 = vmatprep.subr.bf16.mxu0 0
        %578 = vmatpush1.bf16.msra.mxu0 0
        %579 = vmatprep.subr.bf16.mxu0 0
        %580 = vmatpush1.bf16.msra.mxu0 0
        %581 = vmatprep.subr.bf16.mxu0 0
        %582 = vmatpush1.bf16.msra.mxu0 0
        %583 = vmatprep.subr.bf16.mxu0 0
        %584 = vmatpush1.bf16.msra.mxu0 0
        %585 = vmatprep.subr.bf16.mxu0 0
        %586 = vmatpush1.bf16.msra.mxu0 0
        %587 = vmatprep.subr.bf16.mxu0 0
        %588 = vmatpush1.bf16.msra.mxu0 0
        %589 = vmatprep.subr.bf16.mxu0 0
        %590 = vmatpush1.bf16.msra.mxu0 0
        %591 = vmatprep.subr.bf16.mxu0 0
        %592 = vmatpush1.bf16.msra.mxu0 0
        %593 = vmatprep.subr.bf16.mxu0 0
        %594 = vmatpush1.bf16.msra.mxu0 0
        %595 = vmatprep.subr.bf16.mxu0 0
        %596 = vmatpush1.bf16.msra.mxu0 0
        %597 = vmatprep.subr.bf16.mxu0 0
        %598 = vmatpush1.bf16.msra.mxu0 0
        %599 = vmatprep.mubr.bf16.mxu0 0
        %600 = vmatmul.mubr.bf16.gmra.mrb[0].mxu0 %v562
        %v601 = vpop.f32.mrb[0].mxu0
        %v602 = vadd.f32 0.0, %v601
        %v603 = vpop.f32.mrb[0].mxu0
        %v604 = vpop.f32.mrb[0].mxu0
        %v605 = vadd.f32 0.0, %v604
        %v606 = vpop.f32.mrb[0].mxu0
        %607 = vdwg.mxu0
        %v608 = vadd.f32 %v555, %v602
        %v609 = vadd.f32 %v556, %v605
        %s610 = scalar_lea.vmem %s2, 12
        %v611 = vld [vmem:[%s610] sm:$0x3]
        %vm612 = vsmask.f32 6400
        %v613 = vrot.slane %v389, 1
        %v614 = vrot.slane %v391, 2
        %v615 = vor.u32 %v613, %v614
        %v616 = vshrl.u32 %v284, 16
        %v618 = vrot.slane %v616, 1
        %v619 = vrot.slane %v396, 2
        %v620 = vor.u32 %v618, %v619
        %v621 = vsel %vm612, %v615, %v620
        %v623 = vsel %vm290, %v621, 0
        %v626 = vsel %vm294, %v611, 0
        %628 = vmatprep.subr.bf16.mxu0 0
        %629 = vmatpush1.bf16.msra.mxu0 %v626
        %630 = vmatprep.subr.bf16.mxu0 0
        %631 = vmatpush1.bf16.msra.mxu0 0
        %632 = vmatprep.subr.bf16.mxu0 0
        %633 = vmatpush1.bf16.msra.mxu0 0
        %634 = vmatprep.subr.bf16.mxu0 0
        %635 = vmatpush1.bf16.msra.mxu0 0
        %636 = vmatprep.subr.bf16.mxu0 0
        %637 = vmatpush1.bf16.msra.mxu0 0
        %638 = vmatprep.subr.bf16.mxu0 0
        %639 = vmatpush1.bf16.msra.mxu0 0
        %640 = vmatprep.subr.bf16.mxu0 0
        %641 = vmatpush1.bf16.msra.mxu0 0
        %642 = vmatprep.subr.bf16.mxu0 0
        %643 = vmatpush1.bf16.msra.mxu0 0
        %644 = vmatprep.subr.bf16.mxu0 0
        %645 = vmatpush1.bf16.msra.mxu0 0
        %646 = vmatprep.subr.bf16.mxu0 0
        %647 = vmatpush1.bf16.msra.mxu0 0
        %648 = vmatprep.subr.bf16.mxu0 0
        %649 = vmatpush1.bf16.msra.mxu0 0
        %650 = vmatprep.subr.bf16.mxu0 0
        %651 = vmatpush1.bf16.msra.mxu0 0
        %652 = vmatprep.subr.bf16.mxu0 0
        %653 = vmatpush1.bf16.msra.mxu0 0
        %654 = vmatprep.subr.bf16.mxu0 0
        %655 = vmatpush1.bf16.msra.mxu0 0
        %656 = vmatprep.subr.bf16.mxu0 0
        %657 = vmatpush1.bf16.msra.mxu0 0
        %658 = vmatprep.subr.bf16.mxu0 0
        %659 = vmatpush1.bf16.msra.mxu0 0
        %660 = vmatprep.mubr.bf16.mxu0 0
        %661 = vmatmul.mubr.bf16.gmra.mrb[0].mxu0 %v623
        %v662 = vpop.f32.mrb[0].mxu0
        %v663 = vadd.f32 0.0, %v662
        %v664 = vpop.f32.mrb[0].mxu0
        %v665 = vpop.f32.mrb[0].mxu0
        %v666 = vadd.f32 0.0, %v665
        %v667 = vpop.f32.mrb[0].mxu0
        %668 = vdwg.mxu0
        %v669 = vadd.f32 %v608, %v663
        %v670 = vadd.f32 %v609, %v666
        %s671 = scalar_lea.vmem %s2, 14
        %v672 = vld [vmem:[%s671] sm:$0x3]
        %673 = vrot.lane.b32.xlu0 %v621, 124
        %v674 = vpop.permute.xlu0 %673
        %v676 = vsel %vm290, %v674, 0
        %v679 = vsel %vm294, %v672, 0
        %681 = vmatprep.subr.bf16.mxu0 0
        %682 = vmatpush1.bf16.msra.mxu0 %v679
        %683 = vmatprep.subr.bf16.mxu0 0
        %684 = vmatpush1.bf16.msra.mxu0 0
        %685 = vmatprep.subr.bf16.mxu0 0
        %686 = vmatpush1.bf16.msra.mxu0 0
        %687 = vmatprep.subr.bf16.mxu0 0
        %688 = vmatpush1.bf16.msra.mxu0 0
        %689 = vmatprep.subr.bf16.mxu0 0
        %690 = vmatpush1.bf16.msra.mxu0 0
        %691 = vmatprep.subr.bf16.mxu0 0
        %692 = vmatpush1.bf16.msra.mxu0 0
        %693 = vmatprep.subr.bf16.mxu0 0
        %694 = vmatpush1.bf16.msra.mxu0 0
        %695 = vmatprep.subr.bf16.mxu0 0
        %696 = vmatpush1.bf16.msra.mxu0 0
        %697 = vmatprep.subr.bf16.mxu0 0
        %698 = vmatpush1.bf16.msra.mxu0 0
        %699 = vmatprep.subr.bf16.mxu0 0
        %700 = vmatpush1.bf16.msra.mxu0 0
        %701 = vmatprep.subr.bf16.mxu0 0
        %702 = vmatpush1.bf16.msra.mxu0 0
        %703 = vmatprep.subr.bf16.mxu0 0
        %704 = vmatpush1.bf16.msra.mxu0 0
        %705 = vmatprep.subr.bf16.mxu0 0
        %706 = vmatpush1.bf16.msra.mxu0 0
        %707 = vmatprep.subr.bf16.mxu0 0
        %708 = vmatpush1.bf16.msra.mxu0 0
        %709 = vmatprep.subr.bf16.mxu0 0
        %710 = vmatpush1.bf16.msra.mxu0 0
        %711 = vmatprep.subr.bf16.mxu0 0
        %712 = vmatpush1.bf16.msra.mxu0 0
        %713 = vmatprep.mubr.bf16.mxu0 0
        %714 = vmatmul.mubr.bf16.gmra.mrb[0].mxu0 %v676
        %v715 = vpop.f32.mrb[0].mxu0
        %v716 = vadd.f32 0.0, %v715
        %v717 = vpop.f32.mrb[0].mxu0
        %v718 = vpop.f32.mrb[0].mxu0
        %v719 = vadd.f32 0.0, %v718
        %v720 = vpop.f32.mrb[0].mxu0
        %721 = vdwg.mxu0
        %v722 = vadd.f32 %v669, %v716
        %v723 = vadd.f32 %v670, %v719
        %s724 = scalar_lea.vmem %s2, 16
        %v725 = vld [vmem:[%s724] sm:$0x3]
        %vm726 = vcmask 1045504
        %v727 = vrot.slane %v279, 2
        %v728 = vrot.slane %v284, 2
        %v729 = vsel %vm726, %v727, %v728
        %v731 = vsel %vm290, %v729, 0
        %v734 = vsel %vm294, %v725, 0
        %736 = vmatprep.subr.bf16.mxu0 0
        %737 = vmatpush1.bf16.msra.mxu0 %v734
        %738 = vmatprep.subr.bf16.mxu0 0
        %739 = vmatpush1.bf16.msra.mxu0 0
        %740 = vmatprep.subr.bf16.mxu0 0
        %741 = vmatpush1.bf16.msra.mxu0 0
        %742 = vmatprep.subr.bf16.mxu0 0
        %743 = vmatpush1.bf16.msra.mxu0 0
        %744 = vmatprep.subr.bf16.mxu0 0
        %745 = vmatpush1.bf16.msra.mxu0 0
        %746 = vmatprep.subr.bf16.mxu0 0
        %747 = vmatpush1.bf16.msra.mxu0 0
        %748 = vmatprep.subr.bf16.mxu0 0
        %749 = vmatpush1.bf16.msra.mxu0 0
        %750 = vmatprep.subr.bf16.mxu0 0
        %751 = vmatpush1.bf16.msra.mxu0 0
        %752 = vmatprep.subr.bf16.mxu0 0
        %753 = vmatpush1.bf16.msra.mxu0 0
        %754 = vmatprep.subr.bf16.mxu0 0
        %755 = vmatpush1.bf16.msra.mxu0 0
        %756 = vmatprep.subr.bf16.mxu0 0
        %757 = vmatpush1.bf16.msra.mxu0 0
        %758 = vmatprep.subr.bf16.mxu0 0
        %759 = vmatpush1.bf16.msra.mxu0 0
        %760 = vmatprep.subr.bf16.mxu0 0
        %761 = vmatpush1.bf16.msra.mxu0 0
        %762 = vmatprep.subr.bf16.mxu0 0
        %763 = vmatpush1.bf16.msra.mxu0 0
        %764 = vmatprep.subr.bf16.mxu0 0
        %765 = vmatpush1.bf16.msra.mxu0 0
        %766 = vmatprep.subr.bf16.mxu0 0
        %767 = vmatpush1.bf16.msra.mxu0 0
        %768 = vmatprep.mubr.bf16.mxu0 0
        %769 = vmatmul.mubr.bf16.gmra.mrb[0].mxu0 %v731
        %v770 = vpop.f32.mrb[0].mxu0
        %v771 = vadd.f32 0.0, %v770
        %v772 = vpop.f32.mrb[0].mxu0
        %v773 = vpop.f32.mrb[0].mxu0
        %v774 = vadd.f32 0.0, %v773
        %v775 = vpop.f32.mrb[0].mxu0
        %776 = vdwg.mxu0
        %v777 = vadd.f32 %v722, %v771
        %v778 = vadd.f32 %v723, %v774
        %s779 = scalar_lea.vmem %s2, 18
        %v780 = vld [vmem:[%s779] sm:$0x3]
        %781 = vrot.lane.b32.xlu0 %v729, 124
        %v782 = vpop.permute.xlu0 %781
        %v784 = vsel %vm290, %v782, 0
        %v787 = vsel %vm294, %v780, 0
        %789 = vmatprep.subr.bf16.mxu0 0
        %790 = vmatpush1.bf16.msra.mxu0 %v787
        %791 = vmatprep.subr.bf16.mxu0 0
        %792 = vmatpush1.bf16.msra.mxu0 0
        %793 = vmatprep.subr.bf16.mxu0 0
        %794 = vmatpush1.bf16.msra.mxu0 0
        %795 = vmatprep.subr.bf16.mxu0 0
        %796 = vmatpush1.bf16.msra.mxu0 0
        %797 = vmatprep.subr.bf16.mxu0 0
        %798 = vmatpush1.bf16.msra.mxu0 0
        %799 = vmatprep.subr.bf16.mxu0 0
        %800 = vmatpush1.bf16.msra.mxu0 0
        %801 = vmatprep.subr.bf16.mxu0 0
        %802 = vmatpush1.bf16.msra.mxu0 0
        %803 = vmatprep.subr.bf16.mxu0 0
        %804 = vmatpush1.bf16.msra.mxu0 0
        %805 = vmatprep.subr.bf16.mxu0 0
        %806 = vmatpush1.bf16.msra.mxu0 0
        %807 = vmatprep.subr.bf16.mxu0 0
        %808 = vmatpush1.bf16.msra.mxu0 0
        %809 = vmatprep.subr.bf16.mxu0 0
        %810 = vmatpush1.bf16.msra.mxu0 0
        %811 = vmatprep.subr.bf16.mxu0 0
        %812 = vmatpush1.bf16.msra.mxu0 0
        %813 = vmatprep.subr.bf16.mxu0 0
        %814 = vmatpush1.bf16.msra.mxu0 0
        %815 = vmatprep.subr.bf16.mxu0 0
        %816 = vmatpush1.bf16.msra.mxu0 0
        %817 = vmatprep.subr.bf16.mxu0 0
        %818 = vmatpush1.bf16.msra.mxu0 0
        %819 = vmatprep.subr.bf16.mxu0 0
        %820 = vmatpush1.bf16.msra.mxu0 0
        %821 = vmatprep.mubr.bf16.mxu0 0
        %822 = vmatmul.mubr.bf16.gmra.mrb[0].mxu0 %v784
        %v823 = vpop.f32.mrb[0].mxu0
        %v824 = vadd.f32 0.0, %v823
        %v825 = vpop.f32.mrb[0].mxu0
        %v826 = vpop.f32.mrb[0].mxu0
        %v827 = vadd.f32 0.0, %v826
        %v828 = vpop.f32.mrb[0].mxu0
        %829 = vdwg.mxu0
        %v830 = vadd.f32 %v777, %v824
        %v831 = vadd.f32 %v778, %v827
        %s832 = scalar_lea.vmem %s2, 20
        %v833 = vld [vmem:[%s832] sm:$0x3]
        %vm834 = vsmask.f32 5376
        %v835 = vrot.slane %v389, 2
        %v836 = vrot.slane %v391, 3
        %v837 = vor.u32 %v835, %v836
        %v838 = vrot.slane %v616, 2
        %v839 = vrot.slane %v396, 3
        %v840 = vor.u32 %v838, %v839
        %v841 = vsel %vm834, %v837, %v840
        %v843 = vsel %vm290, %v841, 0
        %v846 = vsel %vm294, %v833, 0
        %848 = vmatprep.subr.bf16.mxu0 0
        %849 = vmatpush1.bf16.msra.mxu0 %v846
        %850 = vmatprep.subr.bf16.mxu0 0
        %851 = vmatpush1.bf16.msra.mxu0 0
        %852 = vmatprep.subr.bf16.mxu0 0
        %853 = vmatpush1.bf16.msra.mxu0 0
        %854 = vmatprep.subr.bf16.mxu0 0
        %855 = vmatpush1.bf16.msra.mxu0 0
        %856 = vmatprep.subr.bf16.mxu0 0
        %857 = vmatpush1.bf16.msra.mxu0 0
        %858 = vmatprep.subr.bf16.mxu0 0
        %859 = vmatpush1.bf16.msra.mxu0 0
        %860 = vmatprep.subr.bf16.mxu0 0
        %861 = vmatpush1.bf16.msra.mxu0 0
        %862 = vmatprep.subr.bf16.mxu0 0
        %863 = vmatpush1.bf16.msra.mxu0 0
        %864 = vmatprep.subr.bf16.mxu0 0
        %865 = vmatpush1.bf16.msra.mxu0 0
        %866 = vmatprep.subr.bf16.mxu0 0
        %867 = vmatpush1.bf16.msra.mxu0 0
        %868 = vmatprep.subr.bf16.mxu0 0
        %869 = vmatpush1.bf16.msra.mxu0 0
        %870 = vmatprep.subr.bf16.mxu0 0
        %871 = vmatpush1.bf16.msra.mxu0 0
        %872 = vmatprep.subr.bf16.mxu0 0
        %873 = vmatpush1.bf16.msra.mxu0 0
        %874 = vmatprep.subr.bf16.mxu0 0
        %875 = vmatpush1.bf16.msra.mxu0 0
        %876 = vmatprep.subr.bf16.mxu0 0
        %877 = vmatpush1.bf16.msra.mxu0 0
        %878 = vmatprep.subr.bf16.mxu0 0
        %879 = vmatpush1.bf16.msra.mxu0 0
        %880 = vmatprep.mubr.bf16.mxu0 0
        %881 = vmatmul.mubr.bf16.gmra.mrb[0].mxu0 %v843
        %v882 = vpop.f32.mrb[0].mxu0
        %v883 = vadd.f32 0.0, %v882
        %v884 = vpop.f32.mrb[0].mxu0
        %v885 = vpop.f32.mrb[0].mxu0
        %v886 = vadd.f32 0.0, %v885
        %v887 = vpop.f32.mrb[0].mxu0
        %888 = vdwg.mxu0
        %v889 = vadd.f32 %v830, %v883
        %v890 = vadd.f32 %v831, %v886
        %s891 = scalar_lea.vmem %s2, 22
        %v892 = vld [vmem:[%s891] sm:$0x3]
        %893 = vrot.lane.b32.xlu0 %v841, 124
        %v894 = vpop.permute.xlu0 %893
        %v896 = vsel %vm290, %v894, 0
        %v899 = vsel %vm294, %v892, 0
        %901 = vmatprep.subr.bf16.mxu0 0
        %902 = vmatpush1.bf16.msra.mxu0 %v899
        %903 = vmatprep.subr.bf16.mxu0 0
        %904 = vmatpush1.bf16.msra.mxu0 0
        %905 = vmatprep.subr.bf16.mxu0 0
        %906 = vmatpush1.bf16.msra.mxu0 0
        %907 = vmatprep.subr.bf16.mxu0 0
        %908 = vmatpush1.bf16.msra.mxu0 0
        %909 = vmatprep.subr.bf16.mxu0 0
        %910 = vmatpush1.bf16.msra.mxu0 0
        %911 = vmatprep.subr.bf16.mxu0 0
        %912 = vmatpush1.bf16.msra.mxu0 0
        %913 = vmatprep.subr.bf16.mxu0 0
        %914 = vmatpush1.bf16.msra.mxu0 0
        %915 = vmatprep.subr.bf16.mxu0 0
        %916 = vmatpush1.bf16.msra.mxu0 0
        %917 = vmatprep.subr.bf16.mxu0 0
        %918 = vmatpush1.bf16.msra.mxu0 0
        %919 = vmatprep.subr.bf16.mxu0 0
        %920 = vmatpush1.bf16.msra.mxu0 0
        %921 = vmatprep.subr.bf16.mxu0 0
        %922 = vmatpush1.bf16.msra.mxu0 0
        %923 = vmatprep.subr.bf16.mxu0 0
        %924 = vmatpush1.bf16.msra.mxu0 0
        %925 = vmatprep.subr.bf16.mxu0 0
        %926 = vmatpush1.bf16.msra.mxu0 0
        %927 = vmatprep.subr.bf16.mxu0 0
        %928 = vmatpush1.bf16.msra.mxu0 0
        %929 = vmatprep.subr.bf16.mxu0 0
        %930 = vmatpush1.bf16.msra.mxu0 0
        %931 = vmatprep.subr.bf16.mxu0 0
        %932 = vmatpush1.bf16.msra.mxu0 0
        %933 = vmatprep.mubr.bf16.mxu0 0
        %934 = vmatmul.mubr.bf16.gmra.mrb[0].mxu0 %v896
        %v935 = vpop.f32.mrb[0].mxu0
        %v936 = vadd.f32 0.0, %v935
        %v937 = vpop.f32.mrb[0].mxu0
        %v938 = vpop.f32.mrb[0].mxu0
        %v939 = vadd.f32 0.0, %v938
        %v940 = vpop.f32.mrb[0].mxu0
        %941 = vdwg.mxu0
        %v942 = vadd.f32 %v889, %v936
        %v943 = vadd.f32 %v890, %v939
        %s944 = scalar_lea.vmem %s2, 24
        %v945 = vld [vmem:[%s944] sm:$0x3]
        %vm946 = vcmask 1044480
        %v947 = vrot.slane %v279, 3
        %v948 = vrot.slane %v284, 3
        %v949 = vsel %vm946, %v947, %v948
        %v951 = vsel %vm290, %v949, 0
        %v954 = vsel %vm294, %v945, 0
        %956 = vmatprep.subr.bf16.mxu0 0
        %957 = vmatpush1.bf16.msra.mxu0 %v954
        %958 = vmatprep.subr.bf16.mxu0 0
        %959 = vmatpush1.bf16.msra.mxu0 0
        %960 = vmatprep.subr.bf16.mxu0 0
        %961 = vmatpush1.bf16.msra.mxu0 0
        %962 = vmatprep.subr.bf16.mxu0 0
        %963 = vmatpush1.bf16.msra.mxu0 0
        %964 = vmatprep.subr.bf16.mxu0 0
        %965 = vmatpush1.bf16.msra.mxu0 0
        %966 = vmatprep.subr.bf16.mxu0 0
        %967 = vmatpush1.bf16.msra.mxu0 0
        %968 = vmatprep.subr.bf16.mxu0 0
        %969 = vmatpush1.bf16.msra.mxu0 0
        %970 = vmatprep.subr.bf16.mxu0 0
        %971 = vmatpush1.bf16.msra.mxu0 0
        %972 = vmatprep.subr.bf16.mxu0 0
        %973 = vmatpush1.bf16.msra.mxu0 0
        %974 = vmatprep.subr.bf16.mxu0 0
        %975 = vmatpush1.bf16.msra.mxu0 0
        %976 = vmatprep.subr.bf16.mxu0 0
        %977 = vmatpush1.bf16.msra.mxu0 0
        %978 = vmatprep.subr.bf16.mxu0 0
        %979 = vmatpush1.bf16.msra.mxu0 0
        %980 = vmatprep.subr.bf16.mxu0 0
        %981 = vmatpush1.bf16.msra.mxu0 0
        %982 = vmatprep.subr.bf16.mxu0 0
        %983 = vmatpush1.bf16.msra.mxu0 0
        %984 = vmatprep.subr.bf16.mxu0 0
        %985 = vmatpush1.bf16.msra.mxu0 0
        %986 = vmatprep.subr.bf16.mxu0 0
        %987 = vmatpush1.bf16.msra.mxu0 0
        %988 = vmatprep.mubr.bf16.mxu0 0
        %989 = vmatmul.mubr.bf16.gmra.mrb[0].mxu0 %v951
        %v990 = vpop.f32.mrb[0].mxu0
        %v991 = vadd.f32 0.0, %v990
        %v992 = vpop.f32.mrb[0].mxu0
        %v993 = vpop.f32.mrb[0].mxu0
        %v994 = vadd.f32 0.0, %v993
        %v995 = vpop.f32.mrb[0].mxu0
        %996 = vdwg.mxu0
        %v997 = vadd.f32 %v942, %v991
        %v998 = vadd.f32 %v943, %v994
        %s999 = scalar_lea.vmem %s2, 26
        %v1000 = vld [vmem:[%s999] sm:$0x3]
        %1001 = vrot.lane.b32.xlu0 %v949, 124
        %v1002 = vpop.permute.xlu0 %1001
        %v1004 = vsel %vm290, %v1002, 0
        %v1007 = vsel %vm294, %v1000, 0
        %1009 = vmatprep.subr.bf16.mxu0 0
        %1010 = vmatpush1.bf16.msra.mxu0 %v1007
        %1011 = vmatprep.subr.bf16.mxu0 0
        %1012 = vmatpush1.bf16.msra.mxu0 0
        %1013 = vmatprep.subr.bf16.mxu0 0
        %1014 = vmatpush1.bf16.msra.mxu0 0
        %1015 = vmatprep.subr.bf16.mxu0 0
        %1016 = vmatpush1.bf16.msra.mxu0 0
        %1017 = vmatprep.subr.bf16.mxu0 0
        %1018 = vmatpush1.bf16.msra.mxu0 0
        %1019 = vmatprep.subr.bf16.mxu0 0
        %1020 = vmatpush1.bf16.msra.mxu0 0
        %1021 = vmatprep.subr.bf16.mxu0 0
        %1022 = vmatpush1.bf16.msra.mxu0 0
        %1023 = vmatprep.subr.bf16.mxu0 0
        %1024 = vmatpush1.bf16.msra.mxu0 0
        %1025 = vmatprep.subr.bf16.mxu0 0
        %1026 = vmatpush1.bf16.msra.mxu0 0
        %1027 = vmatprep.subr.bf16.mxu0 0
        %1028 = vmatpush1.bf16.msra.mxu0 0
        %1029 = vmatprep.subr.bf16.mxu0 0
        %1030 = vmatpush1.bf16.msra.mxu0 0
        %1031 = vmatprep.subr.bf16.mxu0 0
        %1032 = vmatpush1.bf16.msra.mxu0 0
        %1033 = vmatprep.subr.bf16.mxu0 0
        %1034 = vmatpush1.bf16.msra.mxu0 0
        %1035 = vmatprep.subr.bf16.mxu0 0
        %1036 = vmatpush1.bf16.msra.mxu0 0
        %1037 = vmatprep.subr.bf16.mxu0 0
        %1038 = vmatpush1.bf16.msra.mxu0 0
        %1039 = vmatprep.subr.bf16.mxu0 0
        %1040 = vmatpush1.bf16.msra.mxu0 0
        %1041 = vmatprep.mubr.bf16.mxu0 0
        %1042 = vmatmul.mubr.bf16.gmra.mrb[0].mxu0 %v1004
        %v1043 = vpop.f32.mrb[0].mxu0
        %v1044 = vadd.f32 0.0, %v1043
        %v1045 = vpop.f32.mrb[0].mxu0
        %v1046 = vpop.f32.mrb[0].mxu0
        %v1047 = vadd.f32 0.0, %v1046
        %v1048 = vpop.f32.mrb[0].mxu0
        %1049 = vdwg.mxu0
        %v1050 = vadd.f32 %v997, %v1044
        %v1051 = vadd.f32 %v998, %v1047
        %s1052 = scalar_lea.vmem %s2, 28
        %v1053 = vld [vmem:[%s1052] sm:$0x3]
        %vm1054 = vsmask.f32 4352
        %v1055 = vrot.slane %v389, 3
        %v1056 = vrot.slane %v391, 4
        %v1057 = vor.u32 %v1055, %v1056
        %v1058 = vrot.slane %v616, 3
        %v1059 = vrot.slane %v396, 4
        %v1060 = vor.u32 %v1058, %v1059
        %v1061 = vsel %vm1054, %v1057, %v1060
        %v1063 = vsel %vm290, %v1061, 0
        %v1066 = vsel %vm294, %v1053, 0
        %1068 = vmatprep.subr.bf16.mxu0 0
        %1069 = vmatpush1.bf16.msra.mxu0 %v1066
        %1070 = vmatprep.subr.bf16.mxu0 0
        %1071 = vmatpush1.bf16.msra.mxu0 0
        %1072 = vmatprep.subr.bf16.mxu0 0
        %1073 = vmatpush1.bf16.msra.mxu0 0
        %1074 = vmatprep.subr.bf16.mxu0 0
        %1075 = vmatpush1.bf16.msra.mxu0 0
        %1076 = vmatprep.subr.bf16.mxu0 0
        %1077 = vmatpush1.bf16.msra.mxu0 0
        %1078 = vmatprep.subr.bf16.mxu0 0
        %1079 = vmatpush1.bf16.msra.mxu0 0
        %1080 = vmatprep.subr.bf16.mxu0 0
        %1081 = vmatpush1.bf16.msra.mxu0 0
        %1082 = vmatprep.subr.bf16.mxu0 0
        %1083 = vmatpush1.bf16.msra.mxu0 0
        %1084 = vmatprep.subr.bf16.mxu0 0
        %1085 = vmatpush1.bf16.msra.mxu0 0
        %1086 = vmatprep.subr.bf16.mxu0 0
        %1087 = vmatpush1.bf16.msra.mxu0 0
        %1088 = vmatprep.subr.bf16.mxu0 0
        %1089 = vmatpush1.bf16.msra.mxu0 0
        %1090 = vmatprep.subr.bf16.mxu0 0
        %1091 = vmatpush1.bf16.msra.mxu0 0
        %1092 = vmatprep.subr.bf16.mxu0 0
        %1093 = vmatpush1.bf16.msra.mxu0 0
        %1094 = vmatprep.subr.bf16.mxu0 0
        %1095 = vmatpush1.bf16.msra.mxu0 0
        %1096 = vmatprep.subr.bf16.mxu0 0
        %1097 = vmatpush1.bf16.msra.mxu0 0
        %1098 = vmatprep.subr.bf16.mxu0 0
        %1099 = vmatpush1.bf16.msra.mxu0 0
        %1100 = vmatprep.mubr.bf16.mxu0 0
        %1101 = vmatmul.mubr.bf16.gmra.mrb[0].mxu0 %v1063
        %v1102 = vpop.f32.mrb[0].mxu0
        %v1103 = vadd.f32 0.0, %v1102
        %v1104 = vpop.f32.mrb[0].mxu0
        %v1105 = vpop.f32.mrb[0].mxu0
        %v1106 = vadd.f32 0.0, %v1105
        %v1107 = vpop.f32.mrb[0].mxu0
        %1108 = vdwg.mxu0
        %v1109 = vadd.f32 %v1050, %v1103
        %v1110 = vadd.f32 %v1051, %v1106
        %s1111 = scalar_lea.vmem %s2, 30
        %v1112 = vld [vmem:[%s1111] sm:$0x3]
        %1113 = vrot.lane.b32.xlu0 %v1061, 124
        %v1114 = vpop.permute.xlu0 %1113
        %v1116 = vsel %vm290, %v1114, 0
        %v1119 = vsel %vm294, %v1112, 0
        %1121 = vmatprep.subr.bf16.mxu0 0
        %1122 = vmatpush1.bf16.msra.mxu0 %v1119
        %1123 = vmatprep.subr.bf16.mxu0 0
        %1124 = vmatpush1.bf16.msra.mxu0 0
        %1125 = vmatprep.subr.bf16.mxu0 0
        %1126 = vmatpush1.bf16.msra.mxu0 0
        %1127 = vmatprep.subr.bf16.mxu0 0
        %1128 = vmatpush1.bf16.msra.mxu0 0
        %1129 = vmatprep.subr.bf16.mxu0 0
        %1130 = vmatpush1.bf16.msra.mxu0 0
        %1131 = vmatprep.subr.bf16.mxu0 0
        %1132 = vmatpush1.bf16.msra.mxu0 0
        %1133 = vmatprep.subr.bf16.mxu0 0
        %1134 = vmatpush1.bf16.msra.mxu0 0
        %1135 = vmatprep.subr.bf16.mxu0 0
        %1136 = vmatpush1.bf16.msra.mxu0 0
        %1137 = vmatprep.subr.bf16.mxu0 0
        %1138 = vmatpush1.bf16.msra.mxu0 0
        %1139 = vmatprep.subr.bf16.mxu0 0
        %1140 = vmatpush1.bf16.msra.mxu0 0
        %1141 = vmatprep.subr.bf16.mxu0 0
        %1142 = vmatpush1.bf16.msra.mxu0 0
        %1143 = vmatprep.subr.bf16.mxu0 0
        %1144 = vmatpush1.bf16.msra.mxu0 0
        %1145 = vmatprep.subr.bf16.mxu0 0
        %1146 = vmatpush1.bf16.msra.mxu0 0
        %1147 = vmatprep.subr.bf16.mxu0 0
        %1148 = vmatpush1.bf16.msra.mxu0 0
        %1149 = vmatprep.subr.bf16.mxu0 0
        %1150 = vmatpush1.bf16.msra.mxu0 0
        %1151 = vmatprep.subr.bf16.mxu0 0
        %1152 = vmatpush1.bf16.msra.mxu0 0
        %1153 = vmatprep.mubr.bf16.mxu0 0
        %1154 = vmatmul.mubr.bf16.gmra.mrb[0].mxu0 %v1116
        %v1155 = vpop.f32.mrb[0].mxu0
        %v1156 = vadd.f32 0.0, %v1155
        %v1157 = vpop.f32.mrb[0].mxu0
        %v1158 = vpop.f32.mrb[0].mxu0
        %v1159 = vadd.f32 0.0, %v1158
        %v1160 = vpop.f32.mrb[0].mxu0
        %1161 = vdwg.mxu0
        %v1162 = vadd.f32 %v1109, %v1156
        %v1163 = vadd.f32 %v1110, %v1159
        %s1164 = scalar_lea.vmem %s2, 32
        %v1165 = vld [vmem:[%s1164] sm:$0x3]
        %vm1166 = vcmask 1043456
        %v1167 = vrot.slane %v279, 4
        %v1168 = vrot.slane %v284, 4
        %v1169 = vsel %vm1166, %v1167, %v1168
        %v1171 = vsel %vm290, %v1169, 0
        %v1174 = vsel %vm294, %v1165, 0
        %1176 = vmatprep.subr.bf16.mxu0 0
        %1177 = vmatpush1.bf16.msra.mxu0 %v1174
        %1178 = vmatprep.subr.bf16.mxu0 0
        %1179 = vmatpush1.bf16.msra.mxu0 0
        %1180 = vmatprep.subr.bf16.mxu0 0
        %1181 = vmatpush1.bf16.msra.mxu0 0
        %1182 = vmatprep.subr.bf16.mxu0 0
        %1183 = vmatpush1.bf16.msra.mxu0 0
        %1184 = vmatprep.subr.bf16.mxu0 0
        %1185 = vmatpush1.bf16.msra.mxu0 0
        %1186 = vmatprep.subr.bf16.mxu0 0
        %1187 = vmatpush1.bf16.msra.mxu0 0
        %1188 = vmatprep.subr.bf16.mxu0 0
        %1189 = vmatpush1.bf16.msra.mxu0 0
        %1190 = vmatprep.subr.bf16.mxu0 0
        %1191 = vmatpush1.bf16.msra.mxu0 0
        %1192 = vmatprep.subr.bf16.mxu0 0
        %1193 = vmatpush1.bf16.msra.mxu0 0
        %1194 = vmatprep.subr.bf16.mxu0 0
        %1195 = vmatpush1.bf16.msra.mxu0 0
        %1196 = vmatprep.subr.bf16.mxu0 0
        %1197 = vmatpush1.bf16.msra.mxu0 0
        %1198 = vmatprep.subr.bf16.mxu0 0
        %1199 = vmatpush1.bf16.msra.mxu0 0
        %1200 = vmatprep.subr.bf16.mxu0 0
        %1201 = vmatpush1.bf16.msra.mxu0 0
        %1202 = vmatprep.subr.bf16.mxu0 0
        %1203 = vmatpush1.bf16.msra.mxu0 0
        %1204 = vmatprep.subr.bf16.mxu0 0
        %1205 = vmatpush1.bf16.msra.mxu0 0
        %1206 = vmatprep.subr.bf16.mxu0 0
        %1207 = vmatpush1.bf16.msra.mxu0 0
        %1208 = vmatprep.mubr.bf16.mxu0 0
        %1209 = vmatmul.mubr.bf16.gmra.mrb[0].mxu0 %v1171
        %v1210 = vpop.f32.mrb[0].mxu0
        %v1211 = vadd.f32 0.0, %v1210
        %v1212 = vpop.f32.mrb[0].mxu0
        %v1213 = vpop.f32.mrb[0].mxu0
        %v1214 = vadd.f32 0.0, %v1213
        %v1215 = vpop.f32.mrb[0].mxu0
        %1216 = vdwg.mxu0
        %v1217 = vadd.f32 %v1162, %v1211
        %v1218 = vadd.f32 %v1163, %v1214
        %s1219 = scalar_lea.vmem %s2, 34
        %v1220 = vld [vmem:[%s1219] sm:$0x3]
        %1221 = vrot.lane.b32.xlu0 %v1169, 124
        %v1222 = vpop.permute.xlu0 %1221
        %v1224 = vsel %vm290, %v1222, 0
        %v1227 = vsel %vm294, %v1220, 0
        %1229 = vmatprep.subr.bf16.mxu0 0
        %1230 = vmatpush1.bf16.msra.mxu0 %v1227
        %1231 = vmatprep.subr.bf16.mxu0 0
        %1232 = vmatpush1.bf16.msra.mxu0 0
        %1233 = vmatprep.subr.bf16.mxu0 0
        %1234 = vmatpush1.bf16.msra.mxu0 0
        %1235 = vmatprep.subr.bf16.mxu0 0
        %1236 = vmatpush1.bf16.msra.mxu0 0
        %1237 = vmatprep.subr.bf16.mxu0 0
        %1238 = vmatpush1.bf16.msra.mxu0 0
        %1239 = vmatprep.subr.bf16.mxu0 0
        %1240 = vmatpush1.bf16.msra.mxu0 0
        %1241 = vmatprep.subr.bf16.mxu0 0
        %1242 = vmatpush1.bf16.msra.mxu0 0
        %1243 = vmatprep.subr.bf16.mxu0 0
        %1244 = vmatpush1.bf16.msra.mxu0 0
        %1245 = vmatprep.subr.bf16.mxu0 0
        %1246 = vmatpush1.bf16.msra.mxu0 0
        %1247 = vmatprep.subr.bf16.mxu0 0
        %1248 = vmatpush1.bf16.msra.mxu0 0
        %1249 = vmatprep.subr.bf16.mxu0 0
        %1250 = vmatpush1.bf16.msra.mxu0 0
        %1251 = vmatprep.subr.bf16.mxu0 0
        %1252 = vmatpush1.bf16.msra.mxu0 0
        %1253 = vmatprep.subr.bf16.mxu0 0
        %1254 = vmatpush1.bf16.msra.mxu0 0
        %1255 = vmatprep.subr.bf16.mxu0 0
        %1256 = vmatpush1.bf16.msra.mxu0 0
        %1257 = vmatprep.subr.bf16.mxu0 0
        %1258 = vmatpush1.bf16.msra.mxu0 0
        %1259 = vmatprep.subr.bf16.mxu0 0
        %1260 = vmatpush1.bf16.msra.mxu0 0
        %1261 = vmatprep.mubr.bf16.mxu0 0
        %1262 = vmatmul.mubr.bf16.gmra.mrb[0].mxu0 %v1224
        %v1263 = vpop.f32.mrb[0].mxu0
        %v1264 = vadd.f32 0.0, %v1263
        %v1265 = vpop.f32.mrb[0].mxu0
        %v1266 = vpop.f32.mrb[0].mxu0
        %v1267 = vadd.f32 0.0, %v1266
        %v1268 = vpop.f32.mrb[0].mxu0
        %1269 = vdwg.mxu0
        %v1270 = vadd.f32 %v1217, %v1264
        %v1271 = vadd.f32 %v1218, %v1267
        %s1272 = scalar_lea.vmem %s2, 36
        %v1273 = vld [vmem:[%s1272] sm:$0x3]
        %vm1274 = vsmask.f32 3328
        %v1275 = vrot.slane %v389, 4
        %v1276 = vrot.slane %v391, 5
        %v1277 = vor.u32 %v1275, %v1276
        %v1278 = vrot.slane %v616, 4
        %v1279 = vrot.slane %v396, 5
        %v1280 = vor.u32 %v1278, %v1279
        %v1281 = vsel %vm1274, %v1277, %v1280
        %v1283 = vsel %vm290, %v1281, 0
        %v1286 = vsel %vm294, %v1273, 0
        %1288 = vmatprep.subr.bf16.mxu0 0
        %1289 = vmatpush1.bf16.msra.mxu0 %v1286
        %1290 = vmatprep.subr.bf16.mxu0 0
        %1291 = vmatpush1.bf16.msra.mxu0 0
        %1292 = vmatprep.subr.bf16.mxu0 0
        %1293 = vmatpush1.bf16.msra.mxu0 0
        %1294 = vmatprep.subr.bf16.mxu0 0
        %1295 = vmatpush1.bf16.msra.mxu0 0
        %1296 = vmatprep.subr.bf16.mxu0 0
        %1297 = vmatpush1.bf16.msra.mxu0 0
        %1298 = vmatprep.subr.bf16.mxu0 0
        %1299 = vmatpush1.bf16.msra.mxu0 0
        %1300 = vmatprep.subr.bf16.mxu0 0
        %1301 = vmatpush1.bf16.msra.mxu0 0
        %1302 = vmatprep.subr.bf16.mxu0 0
        %1303 = vmatpush1.bf16.msra.mxu0 0
        %1304 = vmatprep.subr.bf16.mxu0 0
        %1305 = vmatpush1.bf16.msra.mxu0 0
        %1306 = vmatprep.subr.bf16.mxu0 0
        %1307 = vmatpush1.bf16.msra.mxu0 0
        %1308 = vmatprep.subr.bf16.mxu0 0
        %1309 = vmatpush1.bf16.msra.mxu0 0
        %1310 = vmatprep.subr.bf16.mxu0 0
        %1311 = vmatpush1.bf16.msra.mxu0 0
        %1312 = vmatprep.subr.bf16.mxu0 0
        %1313 = vmatpush1.bf16.msra.mxu0 0
        %1314 = vmatprep.subr.bf16.mxu0 0
        %1315 = vmatpush1.bf16.msra.mxu0 0
        %1316 = vmatprep.subr.bf16.mxu0 0
        %1317 = vmatpush1.bf16.msra.mxu0 0
        %1318 = vmatprep.subr.bf16.mxu0 0
        %1319 = vmatpush1.bf16.msra.mxu0 0
        %1320 = vmatprep.mubr.bf16.mxu0 0
        %1321 = vmatmul.mubr.bf16.gmra.mrb[0].mxu0 %v1283
        %v1322 = vpop.f32.mrb[0].mxu0
        %v1323 = vadd.f32 0.0, %v1322
        %v1324 = vpop.f32.mrb[0].mxu0
        %v1325 = vpop.f32.mrb[0].mxu0
        %v1326 = vadd.f32 0.0, %v1325
        %v1327 = vpop.f32.mrb[0].mxu0
        %1328 = vdwg.mxu0
        %v1329 = vadd.f32 %v1270, %v1323
        %v1330 = vadd.f32 %v1271, %v1326
        %s1331 = scalar_lea.vmem %s2, 38
        %v1332 = vld [vmem:[%s1331] sm:$0x3]
        %1333 = vrot.lane.b32.xlu0 %v1281, 124
        %v1334 = vpop.permute.xlu0 %1333
        %v1336 = vsel %vm290, %v1334, 0
        %v1339 = vsel %vm294, %v1332, 0
        %1341 = vmatprep.subr.bf16.mxu0 0
        %1342 = vmatpush1.bf16.msra.mxu0 %v1339
        %1343 = vmatprep.subr.bf16.mxu0 0
        %1344 = vmatpush1.bf16.msra.mxu0 0
        %1345 = vmatprep.subr.bf16.mxu0 0
        %1346 = vmatpush1.bf16.msra.mxu0 0
        %1347 = vmatprep.subr.bf16.mxu0 0
        %1348 = vmatpush1.bf16.msra.mxu0 0
        %1349 = vmatprep.subr.bf16.mxu0 0
        %1350 = vmatpush1.bf16.msra.mxu0 0
        %1351 = vmatprep.subr.bf16.mxu0 0
        %1352 = vmatpush1.bf16.msra.mxu0 0
        %1353 = vmatprep.subr.bf16.mxu0 0
        %1354 = vmatpush1.bf16.msra.mxu0 0
        %1355 = vmatprep.subr.bf16.mxu0 0
        %1356 = vmatpush1.bf16.msra.mxu0 0
        %1357 = vmatprep.subr.bf16.mxu0 0
        %1358 = vmatpush1.bf16.msra.mxu0 0
        %1359 = vmatprep.subr.bf16.mxu0 0
        %1360 = vmatpush1.bf16.msra.mxu0 0
        %1361 = vmatprep.subr.bf16.mxu0 0
        %1362 = vmatpush1.bf16.msra.mxu0 0
        %1363 = vmatprep.subr.bf16.mxu0 0
        %1364 = vmatpush1.bf16.msra.mxu0 0
        %1365 = vmatprep.subr.bf16.mxu0 0
        %1366 = vmatpush1.bf16.msra.mxu0 0
        %1367 = vmatprep.subr.bf16.mxu0 0
        %1368 = vmatpush1.bf16.msra.mxu0 0
        %1369 = vmatprep.subr.bf16.mxu0 0
        %1370 = vmatpush1.bf16.msra.mxu0 0
        %1371 = vmatprep.subr.bf16.mxu0 0
        %1372 = vmatpush1.bf16.msra.mxu0 0
        %1373 = vmatprep.mubr.bf16.mxu0 0
        %1374 = vmatmul.mubr.bf16.gmra.mrb[0].mxu0 %v1336
        %v1375 = vpop.f32.mrb[0].mxu0
        %v1376 = vadd.f32 0.0, %v1375
        %v1377 = vpop.f32.mrb[0].mxu0
        %v1378 = vpop.f32.mrb[0].mxu0
        %v1379 = vadd.f32 0.0, %v1378
        %v1380 = vpop.f32.mrb[0].mxu0
        %1381 = vdwg.mxu0
        %v1382 = vadd.f32 %v1329, %v1376
        %v1383 = vadd.f32 %v1330, %v1379
        %s1384 = scalar_lea.vmem %s2, 40
        %v1385 = vld [vmem:[%s1384] sm:$0x3]
        %vm1386 = vcmask 1042432
        %v1387 = vrot.slane %v279, 5
        %v1388 = vrot.slane %v284, 5
        %v1389 = vsel %vm1386, %v1387, %v1388
        %v1391 = vsel %vm290, %v1389, 0
        %v1394 = vsel %vm294, %v1385, 0
        %1396 = vmatprep.subr.bf16.mxu0 0
        %1397 = vmatpush1.bf16.msra.mxu0 %v1394
        %1398 = vmatprep.subr.bf16.mxu0 0
        %1399 = vmatpush1.bf16.msra.mxu0 0
        %1400 = vmatprep.subr.bf16.mxu0 0
        %1401 = vmatpush1.bf16.msra.mxu0 0
        %1402 = vmatprep.subr.bf16.mxu0 0
        %1403 = vmatpush1.bf16.msra.mxu0 0
        %1404 = vmatprep.subr.bf16.mxu0 0
        %1405 = vmatpush1.bf16.msra.mxu0 0
        %1406 = vmatprep.subr.bf16.mxu0 0
        %1407 = vmatpush1.bf16.msra.mxu0 0
        %1408 = vmatprep.subr.bf16.mxu0 0
        %1409 = vmatpush1.bf16.msra.mxu0 0
        %1410 = vmatprep.subr.bf16.mxu0 0
        %1411 = vmatpush1.bf16.msra.mxu0 0
        %1412 = vmatprep.subr.bf16.mxu0 0
        %1413 = vmatpush1.bf16.msra.mxu0 0
        %1414 = vmatprep.subr.bf16.mxu0 0
        %1415 = vmatpush1.bf16.msra.mxu0 0
        %1416 = vmatprep.subr.bf16.mxu0 0
        %1417 = vmatpush1.bf16.msra.mxu0 0
        %1418 = vmatprep.subr.bf16.mxu0 0
        %1419 = vmatpush1.bf16.msra.mxu0 0
        %1420 = vmatprep.subr.bf16.mxu0 0
        %1421 = vmatpush1.bf16.msra.mxu0 0
        %1422 = vmatprep.subr.bf16.mxu0 0
        %1423 = vmatpush1.bf16.msra.mxu0 0
        %1424 = vmatprep.subr.bf16.mxu0 0
        %1425 = vmatpush1.bf16.msra.mxu0 0
        %1426 = vmatprep.subr.bf16.mxu0 0
        %1427 = vmatpush1.bf16.msra.mxu0 0
        %1428 = vmatprep.mubr.bf16.mxu0 0
        %1429 = vmatmul.mubr.bf16.gmra.mrb[0].mxu0 %v1391
        %v1430 = vpop.f32.mrb[0].mxu0
        %v1431 = vadd.f32 0.0, %v1430
        %v1432 = vpop.f32.mrb[0].mxu0
        %v1433 = vpop.f32.mrb[0].mxu0
        %v1434 = vadd.f32 0.0, %v1433
        %v1435 = vpop.f32.mrb[0].mxu0
        %1436 = vdwg.mxu0
        %v1437 = vadd.f32 %v1382, %v1431
        %v1438 = vadd.f32 %v1383, %v1434
        %v1439 = vld [vmem:[%s3] sm:$0x1]
        %v1441 = vlaneseq
        %v1442 = vshrl.u32 %v1441, 7
        %v1443 = vsub.s32 0, %v1442
        %v1444 = vrot.slane %v1439, %v1443
        %v1446 = vadd.f32 %v1437, %v1444
        %v1447 = vadd.f32 %v1438, %v1444
        %vm1448 = vcmp.ge.f32.partialorder %v1446, 0.0
        %vm1449 = vcmp.ge.f32.partialorder %v1447, 0.0
        %v1450 = vmul.f32 %v1446, 0.2
        %v1451 = vmul.f32 %v1447, 0.2
        %v1452 = vsel %vm1448, %v1446, %v1450
        %v1453 = vsel %vm1449, %v1447, %v1451
        %v1454 = vpack.c.bf16 %v1453, %v1452
        %v1456 = vunpack.c.l.b16 %v1454
        %v1457 = vunpack.c.h.b16 %v1454
        %v1458 = vpack.c.b16 %v1456, %v1456
        %v1459 = vpack.c.b16 %v1457, %v1457
        %vm1462 = vcmask 60416
        %1463 = vst.msk [vmem:[%s246] sm:$0xf] %vm1462, %v1458
        %1464 = vst.msk [vmem:[%s246 + $0x4] sm:$0xf] %vm1462, %v1459
        %s1465 = sand.u32 %s140, 1
        %s1466 = scalar_lea.sflag [#allocation3], %s1465
        %s1467 = sand.u32 %s140, 1
        %s1468 = smul.addr %s1467, 8
        %s1469 = scalar_lea.vmem [#allocation2], %s1468
        // Predicated region
        $region37: #{tpu_custom_call.1} parent=35 // pred_check
          %p1470 = pneg %p150
        $region38: #{tpu_custom_call.1} parent=35 // pred_check_branch
          %1472 = sbr.rel (%p1470) target = $region40
        $region39: #{tpu_custom_call.1} parent=35 // pred_region
          %s1473 = smul.u32 2, %s23
          %s1475 = ssub.s32 128, 128
          %1476 = vsyncadd %s1466, %s1475
          %s1477 = smul.addr %s22, 8
          %s1478 = sadd.s32 %s1473, %s1477
          %s1479 = smul.addr %s1478, 64
          %s1480 = scalar_lea.hbm %s4, %s1479
          %s1481 = sshll.u32 %s1469, 4
          %s1482 = int_to_ptr.vmem [resolvable:$true] %s1481
          %1487 = dma.vmem_to_hbm [thread:$0]  %s1482, 128, %s1480, %s1466, 64, 64, 4
        $region40: #{tpu_custom_call.1} parent=35 // pred_fallthru
          _
      $region36: #{tpu_custom_call.1} parent=5 // pred_fallthru
        _
      %p1488 = scmp.le.s32.totalorder 2, %s13
      // Predicated region
      $region41: #{tpu_custom_call.1} parent=5 // pred_check
        %p1489 = pneg %p1488
      $region42: #{tpu_custom_call.1} parent=5 // pred_check_branch
        %1491 = sbr.rel (%p1489) target = $region44
      $region43: #{tpu_custom_call.1} parent=5 // pred_region
        %s1492 = ssub.s32 %s13, 2
        // Predicated region
        $region45: #{tpu_custom_call.1} parent=43 // pred_check
          %p1493 = pneg %p156
        $region46: #{tpu_custom_call.1} parent=43 // pred_check_branch
          %1495 = sbr.rel (%p1493) target = $region48
        $region47: #{tpu_custom_call.1} parent=43 // pred_region
          %s1496 = sand.u32 %s141, 1
          %s1497 = scalar_lea.sflag [#allocation3], %s1496
          %s1498 = sand.u32 %s141, 1
          %s1499 = smul.addr %s1498, 8
          %s1500 = scalar_lea.vmem [#allocation2], %s1499
          %1501 = dma.done %s1497, 128
        $region48: #{tpu_custom_call.1} parent=43 // pred_fallthru
          _
      $region44: #{tpu_custom_call.1} parent=5 // pred_fallthru
        _
    $region6: #{tpu_custom_call.1} parent=1 // loop_footer
      %s17 = sadd.s32 1, %s13
    $region7: #{tpu_custom_call.1} parent=1 // loop_footer_branch
      %12 = sbr.rel target = $region3
    $region8: #{tpu_custom_call.1} parent=1 // loop_exit
      _
    %1502 = vsyncpa [#allocation3], 1
    %s1503 = scalar_lea.sflag [#allocation3], 1
    %1504 = vsyncpa %s1503, 1

</llo_original>
